<compile_context>
chip_gen: v7x
topology: tpu7x:2x2x1
jax: 0.10.0
libtpu: 0.0.40
codegen_flags: <defaults>
</compile_context>

<pallas_src>
import numpy as np
import jax
import jax.numpy as jnp
from jax.experimental import pallas as pl
from jax.experimental.pallas import tpu as pltpu

# ---------------------------------------------------------------------------
# Small shapes consistent with the module (dim % num_heads == 0, rpe on)
# ---------------------------------------------------------------------------
B = 2
NUM_HEADS = 4
DIM = 32
HEAD_DIM = DIM // NUM_HEADS
Z_SIZE = 2
X_SIZE = 4
N_TOK = Z_SIZE * Z_SIZE + X_SIZE * X_SIZE          # 20 tokens
N_PAD = 32                                         # padded token count (8-aligned)
HN = NUM_HEADS * N_PAD                             # 128 = one lane tile
SCALE = HEAD_DIM ** (-0.5)


# ---------------------------------------------------------------------------
# Relative position index (same construction as the torch helper)
# ---------------------------------------------------------------------------
def gen_rpe_index(z_shape, x_shape):
    zh, zw = np.meshgrid(np.arange(z_shape[0]), np.arange(z_shape[1]), indexing="ij")
    xh, xw = np.meshgrid(np.arange(x_shape[0]), np.arange(x_shape[1]), indexing="ij")
    h = np.concatenate([zh.reshape(-1), xh.reshape(-1)])
    w = np.concatenate([zw.reshape(-1), xw.reshape(-1)])
    diff_h = h[:, None] - h[None, :]
    diff_w = w[:, None] - w[None, :]
    z_len = z_shape[0] * z_shape[1]
    x_len = x_shape[0] * x_shape[1]
    a = np.concatenate([np.zeros(z_len, np.int64), np.ones(x_len, np.int64)])
    bflag = np.repeat(a[:, None], z_len + x_len, axis=1)
    cflag = np.repeat(a[None, :], z_len + x_len, axis=0)
    diff = np.stack([diff_h, diff_w, bflag, cflag], axis=-1).reshape(-1, 4)
    _, indices = np.unique(diff, axis=0, return_inverse=True)
    return indices.reshape(z_len + x_len, z_len + x_len)


# ---------------------------------------------------------------------------
# Pallas kernel (single invocation, everything resident in VMEM)
# ---------------------------------------------------------------------------
def talking_head_kernel(x_ref, xT_ref, wqv_ref, wkT_ref, wp_ref, bp_ref,
                        rpe_ref, ktm_ref, vm_ref, kl_ref, kw_ref, sm_ref,
                        bw_ref, o_ref):
    f32 = jnp.float32
    bf16 = jnp.bfloat16

    # Fused, batch-folded Q/V projection: one (B*Npad, C) @ (C, 2C) matmul.
    # Q columns already carry the 1/sqrt(head_dim) scale (folded host-side).
    qv = jnp.dot(x_ref[...], wqv_ref[...], preferred_element_type=f32)    # (B*Npad, 2C)

    rpe = rpe_ref[...]                 # (Npad, HN) f32, lane-concatenated rpe bias
    ktm = ktm_ref[...]                 # (C, HN)  f32 0/1 block-diag mask for K^T
    vm = vm_ref[...]                   # (HN, C)  f32 0/1 block-diag mask for V
    wkT = wkT_ref[...]                 # (C, C)   bf16

    # Per-batch lane-concatenated logits S_b (Npad, H*Npad).
    s_rows = []
    for b in range(B):
        r0 = b * N_PAD
        q_b = qv[r0:r0 + N_PAD, 0:DIM]                                     # (Npad, C)
        xT_b = xT_ref[b * DIM:(b + 1) * DIM, :]                            # (C, Npad) bf16
        # K_b^T = wk^T @ x_b^T  (no in-kernel transpose needed)
        kT_b = jnp.dot(wkT, xT_b, preferred_element_type=f32)              # (C, Npad)
        # Block-diagonal K^T: tile along lanes, zero off-head rows.
        kt_bd = (jnp.tile(kT_b, (1, NUM_HEADS)) * ktm).astype(bf16)        # (C, HN)
        s_b = jnp.dot(q_b.astype(bf16), kt_bd, preferred_element_type=f32)  # (Npad, HN)
        s_rows.append(s_b + rpe)
    s_all = jnp.concatenate(s_rows, axis=0)                                # (B*Npad, HN)

    # Talking-head mix #1 (proj_l) as a kron(wl^T, I_Npad) matmul on the MXU.
    # (proj_l bias is constant along the softmax axis -> cancels; dropped.)
    m_all = jnp.dot(s_all.astype(bf16), kl_ref[...], preferred_element_type=f32)

    # Per-head-block softmax, fully lane-dense:
    #  - subtracting the full-row max (a per-row constant) is softmax-invariant
    #    and keeps exp arguments <= 0 (no overflow);
    #  - padded key columns are excluded from the denominator via sum_mask
    #    = kron(I_H, valid-row mask), computed as one MXU matmul that also
    #    broadcasts each head's denominator across its 32-lane block.
    row_max = jnp.max(m_all, axis=-1, keepdims=True)
    e = jnp.exp(m_all - row_max)
    denom = jnp.dot(e.astype(bf16), sm_ref[...], preferred_element_type=f32)
    probs = e * pl.reciprocal(denom, approx=True)

    # Talking-head mix #2 (proj_w) + its bias (does not cancel: applied
    # after softmax; padded columns multiply zero V rows, so it stays exact).
    w_all = jnp.dot(probs.astype(bf16), kw_ref[...], preferred_element_type=f32)
    w_all = w_all + bw_ref[...]

    # attn @ V for all heads at once: block-diagonal V (padded token rows are
    # exactly zero) -> result is already the head-concatenated (Npad, C) slab.
    outs = []
    for b in range(B):
        r0 = b * N_PAD
        v_b = qv[r0:r0 + N_PAD, DIM:2 * DIM]                               # (Npad, C)
        v_bd = (jnp.tile(v_b, (NUM_HEADS, 1)) * vm).astype(bf16)           # (HN, C)
        o_b = jnp.dot(w_all[r0:r0 + N_PAD, :].astype(bf16), v_bd,
                      preferred_element_type=f32)                          # (Npad, C)
        outs.append(o_b)
    head_all = jnp.concatenate(outs, axis=0)                               # (B*Npad, C)

    # Output projection, batch folded: one (B*Npad, C) @ (C, C) matmul.
    o_ref[...] = jnp.dot(head_all.astype(bf16), wp_ref[...],
                         preferred_element_type=f32) + bp_ref[...]


# ---------------------------------------------------------------------------
# Host-side constant layout (one-time weight folds, not per-call pre-scales)
# ---------------------------------------------------------------------------
def _host_constants(wq, wk, wv, wp, rpe_bias, wl, ww, bw):
    bf16 = jnp.bfloat16
    wqv = jnp.concatenate([wq * SCALE, wv], axis=1).astype(bf16)           # (C, 2C)
    wkT = wk.T.astype(bf16)                                                # (C, C)
    wp_b = wp.astype(bf16)

    # rpe: (H, N, N) -> lane-concatenated, zero-padded (Npad, H*Npad)
    rpe_np = np.zeros((N_PAD, HN), np.float32)
    rb = np.asarray(rpe_bias, np.float32)
    for h in range(NUM_HEADS):
        rpe_np[:N_TOK, h * N_PAD:h * N_PAD + N_TOK] = rb[h]
    rpe_cat = jnp.asarray(rpe_np)

    eye_n = np.eye(N_PAD, dtype=np.float32)
    kron_l = jnp.asarray(np.kron(np.asarray(wl, np.float32).T, eye_n)).astype(bf16)
    kron_w = jnp.asarray(np.kron(np.asarray(ww, np.float32).T, eye_n)).astype(bf16)

    # Denominator matrix: kron(I_H, valid-row mask) — sums exp over the 20
    # valid key columns of each head block and broadcasts across its 32 lanes.
    colmask = np.zeros((N_PAD, N_PAD), np.float32)
    colmask[:N_TOK, :] = 1.0
    sum_mask = jnp.asarray(np.kron(np.eye(NUM_HEADS, dtype=np.float32),
                                   colmask)).astype(bf16)

    bw_cat = jnp.asarray(np.kron(np.asarray(bw, np.float32)[None, :],
                                 np.ones((1, N_PAD), np.float32)))         # (1, HN)

    # Block-diagonal structure masks for K^T (C, HN) and V (HN, C).
    ktm_np = np.zeros((DIM, HN), np.float32)
    for h in range(NUM_HEADS):
        ktm_np[h * HEAD_DIM:(h + 1) * HEAD_DIM, h * N_PAD:(h + 1) * N_PAD] = 1.0
    kt_mask = jnp.asarray(ktm_np)
    v_mask = jnp.asarray(np.ascontiguousarray(ktm_np.T))

    return wqv, wkT, wp_b, rpe_cat, kt_mask, v_mask, kron_l, kron_w, sum_mask, bw_cat


def attention_talking_head(x, wq, wk, wv, wp, bp, rpe_bias, wl, bl, ww, bw):
    del bl  # proj_l bias is constant along the softmax axis -> cancels exactly
    (wqv, wkT, wp_b, rpe_cat, kt_mask, v_mask,
     kron_l, kron_w, sum_mask, bw_cat) = _host_constants(wq, wk, wv, wp,
                                                         rpe_bias, wl, ww, bw)

    # Pad tokens 20 -> 32 with zero rows; padded rows/columns are handled
    # in-kernel (zero V rows, denominator mask) and dropped at the end.
    x_pad = jnp.zeros((B, N_PAD, DIM), jnp.float32).at[:, :N_TOK, :].set(x)
    x_all = x_pad.reshape(B * N_PAD, DIM).astype(jnp.bfloat16)             # (B*Npad, C)
    xT_all = jnp.transpose(x_pad, (0, 2, 1)).reshape(B * DIM, N_PAD).astype(jnp.bfloat16)

    vmem = pl.BlockSpec(memory_space=pltpu.MemorySpace.VMEM)
    out = pl.pallas_call(
        talking_head_kernel,
        out_shape=jax.ShapeDtypeStruct((B * N_PAD, DIM), jnp.float32),
        in_specs=[vmem] * 13,
        out_specs=vmem,
    )(x_all, xT_all, wqv, wkT, wp_b, bp.astype(jnp.float32), rpe_cat,
      kt_mask, v_mask, kron_l, kron_w, sum_mask, bw_cat)

    return out.reshape(B, N_PAD, DIM)[:, :N_TOK, :]


# ---------------------------------------------------------------------------
# Pure-JAX reference (mirrors the torch forward exactly, mask=None, drop=0)
# ---------------------------------------------------------------------------
def reference(x, wq, wk, wv, wp, bp, rpe_bias, wl, bl, ww, bw):
    q = (x @ wq) * SCALE
    k = x @ wk
    v = x @ wv
    split = lambda t: t.reshape(B, N_TOK, NUM_HEADS, HEAD_DIM).transpose(0, 2, 1, 3)
    qh, kh, vh = split(q), split(k), split(v)
    attn = jnp.einsum("bhnd,bhmd->bhnm", qh, kh) + rpe_bias[None]
    attn = jnp.einsum("gh,bhnm->bgnm", wl, attn) + bl[None, :, None, None]
    attn = jax.nn.softmax(attn, axis=-1)
    attn = jnp.einsum("gh,bhnm->bgnm", ww, attn) + bw[None, :, None, None]
    out = jnp.einsum("bhnm,bhmd->bhnd", attn, vh)
    out = out.transpose(0, 2, 1, 3).reshape(B, N_TOK, DIM)
    return out @ wp + bp


if __name__ == "__main__":
    key = jax.random.PRNGKey(0)
    ks = jax.random.split(key, 11)

    x = jax.random.normal(ks[0], (B, N_TOK, DIM), jnp.float32)

    # Deterministic synthetic parameters (torch __init__ shapes, (in,out) layout).
    wq = jax.random.normal(ks[1], (DIM, DIM), jnp.float32) * 0.05
    wk = jax.random.normal(ks[2], (DIM, DIM), jnp.float32) * 0.05
    wv = jax.random.normal(ks[3], (DIM, DIM), jnp.float32) * 0.05
    wp = jax.random.normal(ks[4], (DIM, DIM), jnp.float32) * 0.05
    bp = jax.random.normal(ks[5], (1, DIM), jnp.float32) * 0.02
    wl = jnp.eye(NUM_HEADS) + jax.random.normal(ks[6], (NUM_HEADS, NUM_HEADS), jnp.float32) * 0.2
    bl = jax.random.normal(ks[7], (NUM_HEADS,), jnp.float32) * 0.02
    ww = jnp.eye(NUM_HEADS) + jax.random.normal(ks[8], (NUM_HEADS, NUM_HEADS), jnp.float32) * 0.2
    bw = jax.random.normal(ks[9], (NUM_HEADS,), jnp.float32) * 0.02

    # Relative position bias (gather from table is cheap glue, done in plain JAX).
    rpe_index = jnp.asarray(gen_rpe_index((Z_SIZE, Z_SIZE), (X_SIZE, X_SIZE)))
    num_rpe = int(rpe_index.max()) + 1
    rpe_table = jax.random.normal(ks[10], (NUM_HEADS, num_rpe), jnp.float32) * 0.02
    rpe_bias = rpe_table[:, rpe_index]                      # (H, N, N)

    out = attention_talking_head(x, wq, wk, wv, wp, bp, rpe_bias, wl, bl, ww, bw)
    out = jax.block_until_ready(out)

    ref = reference(x, wq, wk, wv, wp, bp, rpe_bias, wl, bl, ww, bw)
    np.testing.assert_allclose(np.asarray(out), np.asarray(ref), rtol=2e-2, atol=2e-2)

    print("KERNEL_OK")
</pallas_src>

<mosaic_0001>
module attributes {stable_mosaic.version = 11 : i64} {
  func.func @talking_head_kernel(%arg0: memref<64x32xbf16, #tpu.memory_space<vmem>>, %arg1: memref<64x32xbf16, #tpu.memory_space<vmem>>, %arg2: memref<32x64xbf16, #tpu.memory_space<vmem>>, %arg3: memref<32x32xbf16, #tpu.memory_space<vmem>>, %arg4: memref<32x32xbf16, #tpu.memory_space<vmem>>, %arg5: memref<1x32xf32, #tpu.memory_space<vmem>>, %arg6: memref<32x128xf32, #tpu.memory_space<vmem>>, %arg7: memref<32x128xf32, #tpu.memory_space<vmem>>, %arg8: memref<128x32xf32, #tpu.memory_space<vmem>>, %arg9: memref<128x128xbf16, #tpu.memory_space<vmem>>, %arg10: memref<128x128xbf16, #tpu.memory_space<vmem>>, %arg11: memref<128x128xbf16, #tpu.memory_space<vmem>>, %arg12: memref<1x128xf32, #tpu.memory_space<vmem>>, %arg13: memref<64x32xf32, #tpu.memory_space<vmem>>) attributes {dimension_semantics = [], scalar_prefetch = 0 : i64, scratch_operands = 0 : i64, tpu.core_type = #tpu.core_type<tc>} {
    %c0 = arith.constant 0 : index
    %c0_0 = arith.constant 0 : index
    %0 = vector.load %arg0[%c0, %c0_0] : memref<64x32xbf16, #tpu.memory_space<vmem>>, vector<64x32xbf16>
    %c0_1 = arith.constant 0 : index
    %c0_2 = arith.constant 0 : index
    %1 = vector.load %arg2[%c0_1, %c0_2] : memref<32x64xbf16, #tpu.memory_space<vmem>>, vector<32x64xbf16>
    %cst = arith.constant dense<0.000000e+00> : vector<64x64xf32>
    %2 = tpu.matmul %0, %1, %cst {dimension_numbers = #tpu.dot_dimension_numbers<[1], [0], [0], [1], [0, 0, 1, 1], [], []>} : vector<64x32xbf16>, vector<32x64xbf16>, vector<64x64xf32> -> vector<64x64xf32>
    %c0_3 = arith.constant 0 : index
    %c0_4 = arith.constant 0 : index
    %3 = vector.load %arg6[%c0_3, %c0_4] : memref<32x128xf32, #tpu.memory_space<vmem>>, vector<32x128xf32>
    %c0_5 = arith.constant 0 : index
    %c0_6 = arith.constant 0 : index
    %4 = vector.load %arg7[%c0_5, %c0_6] : memref<32x128xf32, #tpu.memory_space<vmem>>, vector<32x128xf32>
    %c0_7 = arith.constant 0 : index
    %c0_8 = arith.constant 0 : index
    %5 = vector.load %arg8[%c0_7, %c0_8] : memref<128x32xf32, #tpu.memory_space<vmem>>, vector<128x32xf32>
    %c0_9 = arith.constant 0 : index
    %c0_10 = arith.constant 0 : index
    %6 = vector.load %arg3[%c0_9, %c0_10] : memref<32x32xbf16, #tpu.memory_space<vmem>>, vector<32x32xbf16>
    %7 = vector.extract_strided_slice %2 {offsets = [0, 0], sizes = [32, 32], strides = [1, 1]} : vector<64x64xf32> to vector<32x32xf32>
    %c0_11 = arith.constant 0 : index
    %c0_12 = arith.constant 0 : index
    %8 = vector.load %arg1[%c0_11, %c0_12] : memref<64x32xbf16, #tpu.memory_space<vmem>>, vector<32x32xbf16>
    %cst_13 = arith.constant dense<0.000000e+00> : vector<32x32xf32>
    %9 = tpu.matmul %6, %8, %cst_13 {dimension_numbers = #tpu.dot_dimension_numbers<[1], [0], [0], [1], [0, 0, 1, 1], [], []>} : vector<32x32xbf16>, vector<32x32xbf16>, vector<32x32xf32> -> vector<32x32xf32>
    %10 = tpu.concatenate %9, %9, %9, %9 in 1 : vector<32x32xf32>, vector<32x32xf32>, vector<32x32xf32>, vector<32x32xf32> -> vector<32x128xf32>
    %11 = arith.mulf %10, %4 : vector<32x128xf32>
    %12 = arith.truncf %11 : vector<32x128xf32> to vector<32x128xbf16>
    %13 = arith.truncf %7 : vector<32x32xf32> to vector<32x32xbf16>
    %cst_14 = arith.constant dense<0.000000e+00> : vector<32x128xf32>
    %14 = tpu.matmul %13, %12, %cst_14 {dimension_numbers = #tpu.dot_dimension_numbers<[1], [0], [0], [1], [0, 0, 1, 1], [], []>} : vector<32x32xbf16>, vector<32x128xbf16>, vector<32x128xf32> -> vector<32x128xf32>
    %15 = arith.addf %14, %3 : vector<32x128xf32>
    %16 = vector.extract_strided_slice %2 {offsets = [32, 0], sizes = [32, 32], strides = [1, 1]} : vector<64x64xf32> to vector<32x32xf32>
    %c32 = arith.constant 32 : index
    %c0_15 = arith.constant 0 : index
    %17 = vector.load %arg1[%c32, %c0_15] : memref<64x32xbf16, #tpu.memory_space<vmem>>, vector<32x32xbf16>
    %cst_16 = arith.constant dense<0.000000e+00> : vector<32x32xf32>
    %18 = tpu.matmul %6, %17, %cst_16 {dimension_numbers = #tpu.dot_dimension_numbers<[1], [0], [0], [1], [0, 0, 1, 1], [], []>} : vector<32x32xbf16>, vector<32x32xbf16>, vector<32x32xf32> -> vector<32x32xf32>
    %19 = tpu.concatenate %18, %18, %18, %18 in 1 : vector<32x32xf32>, vector<32x32xf32>, vector<32x32xf32>, vector<32x32xf32> -> vector<32x128xf32>
    %20 = arith.mulf %19, %4 : vector<32x128xf32>
    %21 = arith.truncf %20 : vector<32x128xf32> to vector<32x128xbf16>
    %22 = arith.truncf %16 : vector<32x32xf32> to vector<32x32xbf16>
    %cst_17 = arith.constant dense<0.000000e+00> : vector<32x128xf32>
    %23 = tpu.matmul %22, %21, %cst_17 {dimension_numbers = #tpu.dot_dimension_numbers<[1], [0], [0], [1], [0, 0, 1, 1], [], []>} : vector<32x32xbf16>, vector<32x128xbf16>, vector<32x128xf32> -> vector<32x128xf32>
    %24 = arith.addf %23, %3 : vector<32x128xf32>
    %25 = tpu.concatenate %15, %24 in 0 : vector<32x128xf32>, vector<32x128xf32> -> vector<64x128xf32>
    %26 = arith.truncf %25 : vector<64x128xf32> to vector<64x128xbf16>
    %c0_18 = arith.constant 0 : index
    %c0_19 = arith.constant 0 : index
    %27 = vector.load %arg9[%c0_18, %c0_19] : memref<128x128xbf16, #tpu.memory_space<vmem>>, vector<128x128xbf16>
    %cst_20 = arith.constant dense<0.000000e+00> : vector<64x128xf32>
    %28 = tpu.matmul %26, %27, %cst_20 {dimension_numbers = #tpu.dot_dimension_numbers<[1], [0], [0], [1], [0, 0, 1, 1], [], []>} : vector<64x128xbf16>, vector<128x128xbf16>, vector<64x128xf32> -> vector<64x128xf32>
    %cst_21 = arith.constant dense<0xFF800000> : vector<64xf32>
    %29 = vector.multi_reduction <maximumf>, %28, %cst_21 [1] : vector<64x128xf32> to vector<64xf32>
    %30 = vector.shape_cast %29 : vector<64xf32> to vector<64x1xf32>
    %31 = vector.broadcast %30 : vector<64x1xf32> to vector<64x128xf32>
    %32 = arith.subf %28, %31 : vector<64x128xf32>
    %33 = math.exp %32 : vector<64x128xf32>
    %34 = arith.truncf %33 : vector<64x128xf32> to vector<64x128xbf16>
    %c0_22 = arith.constant 0 : index
    %c0_23 = arith.constant 0 : index
    %35 = vector.load %arg11[%c0_22, %c0_23] : memref<128x128xbf16, #tpu.memory_space<vmem>>, vector<128x128xbf16>
    %cst_24 = arith.constant dense<0.000000e+00> : vector<64x128xf32>
    %36 = tpu.matmul %34, %35, %cst_24 {dimension_numbers = #tpu.dot_dimension_numbers<[1], [0], [0], [1], [0, 0, 1, 1], [], []>} : vector<64x128xbf16>, vector<128x128xbf16>, vector<64x128xf32> -> vector<64x128xf32>
    %37 = tpu.reciprocal %36 {approx = true} : vector<64x128xf32> -> vector<64x128xf32>
    %38 = arith.mulf %33, %37 : vector<64x128xf32>
    %39 = arith.truncf %38 : vector<64x128xf32> to vector<64x128xbf16>
    %c0_25 = arith.constant 0 : index
    %c0_26 = arith.constant 0 : index
    %40 = vector.load %arg10[%c0_25, %c0_26] : memref<128x128xbf16, #tpu.memory_space<vmem>>, vector<128x128xbf16>
    %cst_27 = arith.constant dense<0.000000e+00> : vector<64x128xf32>
    %41 = tpu.matmul %39, %40, %cst_27 {dimension_numbers = #tpu.dot_dimension_numbers<[1], [0], [0], [1], [0, 0, 1, 1], [], []>} : vector<64x128xbf16>, vector<128x128xbf16>, vector<64x128xf32> -> vector<64x128xf32>
    %c0_28 = arith.constant 0 : index
    %c0_29 = arith.constant 0 : index
    %42 = vector.load %arg12[%c0_28, %c0_29] : memref<1x128xf32, #tpu.memory_space<vmem>>, vector<1x128xf32>
    %43 = vector.broadcast %42 : vector<1x128xf32> to vector<64x128xf32>
    %44 = arith.addf %41, %43 : vector<64x128xf32>
    %45 = vector.extract_strided_slice %2 {offsets = [0, 32], sizes = [32, 32], strides = [1, 1]} : vector<64x64xf32> to vector<32x32xf32>
    %46 = tpu.concatenate %45, %45, %45, %45 in 0 : vector<32x32xf32>, vector<32x32xf32>, vector<32x32xf32>, vector<32x32xf32> -> vector<128x32xf32>
    %47 = arith.mulf %46, %5 : vector<128x32xf32>
    %48 = arith.truncf %47 : vector<128x32xf32> to vector<128x32xbf16>
    %49 = vector.extract_strided_slice %44 {offsets = [0, 0], sizes = [32, 128], strides = [1, 1]} : vector<64x128xf32> to vector<32x128xf32>
    %50 = arith.truncf %49 : vector<32x128xf32> to vector<32x128xbf16>
    %cst_30 = arith.constant dense<0.000000e+00> : vector<32x32xf32>
    %51 = tpu.matmul %50, %48, %cst_30 {dimension_numbers = #tpu.dot_dimension_numbers<[1], [0], [0], [1], [0, 0, 1, 1], [], []>} : vector<32x128xbf16>, vector<128x32xbf16>, vector<32x32xf32> -> vector<32x32xf32>
    %52 = vector.extract_strided_slice %2 {offsets = [32, 32], sizes = [32, 32], strides = [1, 1]} : vector<64x64xf32> to vector<32x32xf32>
    %53 = tpu.concatenate %52, %52, %52, %52 in 0 : vector<32x32xf32>, vector<32x32xf32>, vector<32x32xf32>, vector<32x32xf32> -> vector<128x32xf32>
    %54 = arith.mulf %53, %5 : vector<128x32xf32>
    %55 = arith.truncf %54 : vector<128x32xf32> to vector<128x32xbf16>
    %56 = vector.extract_strided_slice %44 {offsets = [32, 0], sizes = [32, 128], strides = [1, 1]} : vector<64x128xf32> to vector<32x128xf32>
    %57 = arith.truncf %56 : vector<32x128xf32> to vector<32x128xbf16>
    %cst_31 = arith.constant dense<0.000000e+00> : vector<32x32xf32>
    %58 = tpu.matmul %57, %55, %cst_31 {dimension_numbers = #tpu.dot_dimension_numbers<[1], [0], [0], [1], [0, 0, 1, 1], [], []>} : vector<32x128xbf16>, vector<128x32xbf16>, vector<32x32xf32> -> vector<32x32xf32>
    %59 = tpu.concatenate %51, %58 in 0 : vector<32x32xf32>, vector<32x32xf32> -> vector<64x32xf32>
    %60 = arith.truncf %59 : vector<64x32xf32> to vector<64x32xbf16>
    %c0_32 = arith.constant 0 : index
    %c0_33 = arith.constant 0 : index
    %61 = vector.load %arg4[%c0_32, %c0_33] : memref<32x32xbf16, #tpu.memory_space<vmem>>, vector<32x32xbf16>
    %cst_34 = arith.constant dense<0.000000e+00> : vector<64x32xf32>
    %62 = tpu.matmul %60, %61, %cst_34 {dimension_numbers = #tpu.dot_dimension_numbers<[1], [0], [0], [1], [0, 0, 1, 1], [], []>} : vector<64x32xbf16>, vector<32x32xbf16>, vector<64x32xf32> -> vector<64x32xf32>
    %c0_35 = arith.constant 0 : index
    %c0_36 = arith.constant 0 : index
    %63 = vector.load %arg5[%c0_35, %c0_36] : memref<1x32xf32, #tpu.memory_space<vmem>>, vector<1x32xf32>
    %64 = vector.broadcast %63 : vector<1x32xf32> to vector<64x32xf32>
    %65 = arith.addf %62, %64 : vector<64x32xf32>
    %c0_37 = arith.constant 0 : index
    %c0_38 = arith.constant 0 : index
    %66 = vector.load %arg13[%c0_37, %c0_38] : memref<64x32xf32, #tpu.memory_space<vmem>>, vector<64x32xf32>
    tpu.vector_store %arg13[%c0_37, %c0_38], %65 {strides = array<i32>} : memref<64x32xf32, #tpu.memory_space<vmem>>, vector<64x32xf32>,
    return
  }
}

</mosaic_0001>

<llo_original>
// kernel: tpu_custom_call.1
$region0: #{tpu_custom_call.1}
  #allocation0 [shape = 'u32[]', space=smem, size = 0x4, offset = 0x4, fixed_abs, tag = 'smem constant byte address 0x4 - core index']
  #allocation1 [shape = 'u32[144,128]{1,0:T(1,128)}', space=vmem, size = 0x12000, scoped, tag = 'internal scratch']
  %s0 = inlined_call_operand.vmem [shape: bf16[64,32], index: 0, kind: input, shape index: {}]
  %s1 = inlined_call_operand.vmem [shape: bf16[64,32], index: 1, kind: input, shape index: {}]
  %s2 = inlined_call_operand.hbm [shape: bf16[32,64], index: 2, kind: input, shape index: {}]
  %s3 = inlined_call_operand.hbm [shape: bf16[32,32], index: 3, kind: input, shape index: {}]
  %s4 = inlined_call_operand.hbm [shape: bf16[32,32], index: 4, kind: input, shape index: {}]
  %s5 = inlined_call_operand.vmem [shape: f32[1,32], index: 5, kind: input, shape index: {}]
  %s6 = inlined_call_operand.vmem [shape: f32[32,128], index: 6, kind: input, shape index: {}]
  %s7 = inlined_call_operand.hbm [shape: f32[32,128], index: 7, kind: input, shape index: {}]
  %s8 = inlined_call_operand.vmem [shape: f32[128,32], index: 8, kind: input, shape index: {}]
  %s9 = inlined_call_operand.vmem [shape: bf16[128,128], index: 9, kind: input, shape index: {}]
  %s10 = inlined_call_operand.vmem [shape: bf16[128,128], index: 10, kind: input, shape index: {}]
  %s11 = inlined_call_operand.vmem [shape: bf16[128,128], index: 11, kind: input, shape index: {}]
  %s12 = inlined_call_operand.vmem [shape: f32[1,128], index: 12, kind: input, shape index: {}]
  %s13 = inlined_call_operand.vmem [shape: f32[64,32], index: 13, kind: output, shape index: {}]
  %s14 = sld [smem:[#allocation0]]
  $region78: #{tpu_custom_call.1} parent=0
    _
  %s16 = ssub.s32 1, %s14
  %s17 = scalar_select 0, %s16, %s14
  $region1: #{tpu_custom_call.1} parent=0
    #allocation2 [shape = 'u8[8192]{0}', space=vmem, size = 0x2000, scoped, tag = 'input window, operand 2, single buffered']
    #allocation3 [shape = 's32[1]{0}', space=sflag, size = 0x4, scoped, tag = 'scoped memory for tpu_custom_call.1']
    #allocation4 [shape = 'u8[8192]{0}', space=vmem, size = 0x2000, scoped, tag = 'input window, operand 3, single buffered']
    #allocation5 [shape = 's32[1]{0}', space=sflag, size = 0x4, scoped, tag = 'scoped memory for tpu_custom_call.1']
    #allocation6 [shape = 'u8[8192]{0}', space=vmem, size = 0x2000, scoped, tag = 'input window, operand 4, single buffered']
    #allocation7 [shape = 'u8[16384]{0}', space=vmem, size = 0x4000, scoped, tag = 'input window, operand 7, single buffered']
    #allocation8 [shape = 's32[1]{0}', space=sflag, size = 0x4, scoped, tag = 'scoped memory for tpu_custom_call.1']
    %18 = vsyncpa [#allocation3], 0
    %19 = vsyncpa [#allocation5], 0
    %20 = vsyncpa [#allocation8], 0
    // Predicated region
    $region2: #{tpu_custom_call.1} parent=1 // pred_check
      _
    $region3: #{tpu_custom_call.1} parent=1 // pred_check_branch
      %22 = sbr.rel (0) target = $region5
    $region4: #{tpu_custom_call.1} parent=1 // pred_region
      _
    $region5: #{tpu_custom_call.1} parent=1 // pred_fallthru
      _
    // Predicated region
    $region6: #{tpu_custom_call.1} parent=1 // pred_check
      _
    $region7: #{tpu_custom_call.1} parent=1 // pred_check_branch
      %24 = sbr.rel (0) target = $region9
    $region8: #{tpu_custom_call.1} parent=1 // pred_region
      _
    $region9: #{tpu_custom_call.1} parent=1 // pred_fallthru
      _
    // Predicated region
    $region10: #{tpu_custom_call.1} parent=1 // pred_check
      _
    $region11: #{tpu_custom_call.1} parent=1 // pred_check_branch
      %26 = sbr.rel (0) target = $region13
    $region12: #{tpu_custom_call.1} parent=1 // pred_region
      %s28 = ssub.s32 256, 256
      %29 = vsyncadd [#allocation3], %s28
      %s30 = sshll.u32 [#allocation2], 4
      %s31 = int_to_ptr.vmem [resolvable:$true] %s30
      %36 = dma.hbm_to_vmem [thread:$0]  %s2, 256, %s31, [#allocation3], 64, 64, 4
    $region13: #{tpu_custom_call.1} parent=1 // pred_fallthru
      _
    // Predicated region
    $region14: #{tpu_custom_call.1} parent=1 // pred_check
      _
    $region15: #{tpu_custom_call.1} parent=1 // pred_check_branch
      %38 = sbr.rel (0) target = $region17
    $region16: #{tpu_custom_call.1} parent=1 // pred_region
      %s40 = ssub.s32 256, 256
      %41 = vsyncadd [#allocation5], %s40
      %s42 = sshll.u32 [#allocation4], 4
      %s43 = int_to_ptr.vmem [resolvable:$true] %s42
      %48 = dma.hbm_to_vmem [thread:$0]  %s3, 256, %s43, [#allocation5], 64, 64, 4
    $region17: #{tpu_custom_call.1} parent=1 // pred_fallthru
      _
    // Predicated region
    $region18: #{tpu_custom_call.1} parent=1 // pred_check
      _
    $region19: #{tpu_custom_call.1} parent=1 // pred_check_branch
      %50 = sbr.rel (0) target = $region21
    $region20: #{tpu_custom_call.1} parent=1 // pred_region
      %s52 = ssub.s32 256, 256
      %53 = vsyncadd [#allocation5], %s52
      %s54 = sshll.u32 [#allocation6], 4
      %s55 = int_to_ptr.vmem [resolvable:$true] %s54
      %60 = dma.hbm_to_vmem [thread:$0]  %s4, 256, %s55, [#allocation5], 64, 64, 4
    $region21: #{tpu_custom_call.1} parent=1 // pred_fallthru
      _
    // Predicated region
    $region22: #{tpu_custom_call.1} parent=1 // pred_check
      _
    $region23: #{tpu_custom_call.1} parent=1 // pred_check_branch
      %62 = sbr.rel (0) target = $region25
    $region24: #{tpu_custom_call.1} parent=1 // pred_region
      _
    $region25: #{tpu_custom_call.1} parent=1 // pred_fallthru
      _
    // Predicated region
    $region26: #{tpu_custom_call.1} parent=1 // pred_check
      _
    $region27: #{tpu_custom_call.1} parent=1 // pred_check_branch
      %64 = sbr.rel (0) target = $region29
    $region28: #{tpu_custom_call.1} parent=1 // pred_region
      _
    $region29: #{tpu_custom_call.1} parent=1 // pred_fallthru
      _
    // Predicated region
    $region30: #{tpu_custom_call.1} parent=1 // pred_check
      _
    $region31: #{tpu_custom_call.1} parent=1 // pred_check_branch
      %66 = sbr.rel (0) target = $region33
    $region32: #{tpu_custom_call.1} parent=1 // pred_region
      %s68 = ssub.s32 512, 512
      %69 = vsyncadd [#allocation8], %s68
      %s70 = sshll.u32 [#allocation7], 4
      %s71 = int_to_ptr.vmem [resolvable:$true] %s70
      %76 = dma.hbm_to_vmem [thread:$0]  %s7, 512, %s71, [#allocation8], 128, 128, 8
    $region33: #{tpu_custom_call.1} parent=1 // pred_fallthru
      _
    // Predicated region
    $region34: #{tpu_custom_call.1} parent=1 // pred_check
      _
    $region35: #{tpu_custom_call.1} parent=1 // pred_check_branch
      %78 = sbr.rel (0) target = $region37
    $region36: #{tpu_custom_call.1} parent=1 // pred_region
      _
    $region37: #{tpu_custom_call.1} parent=1 // pred_fallthru
      _
    // Predicated region
    $region38: #{tpu_custom_call.1} parent=1 // pred_check
      _
    $region39: #{tpu_custom_call.1} parent=1 // pred_check_branch
      %80 = sbr.rel (0) target = $region41
    $region40: #{tpu_custom_call.1} parent=1 // pred_region
      _
    $region41: #{tpu_custom_call.1} parent=1 // pred_fallthru
      _
    // Predicated region
    $region42: #{tpu_custom_call.1} parent=1 // pred_check
      _
    $region43: #{tpu_custom_call.1} parent=1 // pred_check_branch
      %82 = sbr.rel (0) target = $region45
    $region44: #{tpu_custom_call.1} parent=1 // pred_region
      _
    $region45: #{tpu_custom_call.1} parent=1 // pred_fallthru
      _
    // Predicated region
    $region46: #{tpu_custom_call.1} parent=1 // pred_check
      _
    $region47: #{tpu_custom_call.1} parent=1 // pred_check_branch
      %84 = sbr.rel (0) target = $region49
    $region48: #{tpu_custom_call.1} parent=1 // pred_region
      _
    $region49: #{tpu_custom_call.1} parent=1 // pred_fallthru
      _
    // Predicated region
    $region50: #{tpu_custom_call.1} parent=1 // pred_check
      _
    $region51: #{tpu_custom_call.1} parent=1 // pred_check_branch
      %86 = sbr.rel (0) target = $region53
    $region52: #{tpu_custom_call.1} parent=1 // pred_region
      _
    $region53: #{tpu_custom_call.1} parent=1 // pred_fallthru
      _
    // Predicated region
    $region54: #{tpu_custom_call.1} parent=1 // pred_check
      _
    $region55: #{tpu_custom_call.1} parent=1 // pred_check_branch
      %88 = sbr.rel (0) target = $region57
    $region56: #{tpu_custom_call.1} parent=1 // pred_region
      %89 = dma.done [#allocation3], 256
    $region57: #{tpu_custom_call.1} parent=1 // pred_fallthru
      _
    // Predicated region
    $region58: #{tpu_custom_call.1} parent=1 // pred_check
      _
    $region59: #{tpu_custom_call.1} parent=1 // pred_check_branch
      %91 = sbr.rel (0) target = $region61
    $region60: #{tpu_custom_call.1} parent=1 // pred_region
      %92 = dma.done [#allocation5], 256
    $region61: #{tpu_custom_call.1} parent=1 // pred_fallthru
      _
    // Predicated region
    $region62: #{tpu_custom_call.1} parent=1 // pred_check
      _
    $region63: #{tpu_custom_call.1} parent=1 // pred_check_branch
      %94 = sbr.rel (0) target = $region65
    $region64: #{tpu_custom_call.1} parent=1 // pred_region
      %95 = dma.done [#allocation5], 256
    $region65: #{tpu_custom_call.1} parent=1 // pred_fallthru
      _
    // Predicated region
    $region66: #{tpu_custom_call.1} parent=1 // pred_check
      _
    $region67: #{tpu_custom_call.1} parent=1 // pred_check_branch
      %97 = sbr.rel (0) target = $region69
    $region68: #{tpu_custom_call.1} parent=1 // pred_region
      %98 = dma.done [#allocation8], 512
    $region69: #{tpu_custom_call.1} parent=1 // pred_fallthru
      _
    %v100 = vld [vmem:[%s0] sm:$0xf]
    %v101 = vld [vmem:[%s0 + $0x4] sm:$0xf]
    %v102 = vld [vmem:[%s0 + $0x8] sm:$0xf]
    %v103 = vld [vmem:[%s0 + $0xc] sm:$0xf]
    %v104 = vld [vmem:[%s0 + $0x10] sm:$0xf]
    %v105 = vld [vmem:[%s0 + $0x14] sm:$0xf]
    %v106 = vld [vmem:[%s0 + $0x18] sm:$0xf]
    %v107 = vld [vmem:[%s0 + $0x1c] sm:$0xf]
    %v108 = vld [vmem:[#allocation2] sm:$0xf]
    %v109 = vld [vmem:[#allocation2 + $0x4] sm:$0xf]
    %v110 = vld [vmem:[#allocation2 + $0x8] sm:$0xf]
    %v111 = vld [vmem:[#allocation2 + $0xc] sm:$0xf]
    %v120 = vunpack.c.l.b16 %v100
    %v121 = vunpack.c.l.b16 %v101
    %v122 = vunpack.c.l.b16 %v102
    %v123 = vunpack.c.l.b16 %v103
    %v124 = vunpack.c.l.b16 %v104
    %v125 = vunpack.c.l.b16 %v105
    %v126 = vunpack.c.l.b16 %v106
    %v127 = vunpack.c.l.b16 %v107
    %v128 = vpack.c.b16 %v121, %v120
    %v129 = vpack.c.b16 %v123, %v122
    %v130 = vpack.c.b16 %v125, %v124
    %v131 = vpack.c.b16 %v127, %v126
    %v136 = vunpack.c.l.b16 %v108
    %v137 = vunpack.c.l.b16 %v109
    %v138 = vunpack.c.l.b16 %v110
    %v139 = vunpack.c.l.b16 %v111
    %v140 = vpack.c.b16 %v137, %v136
    %v141 = vpack.c.b16 %v139, %v138
    %vm144 = vcmask 261120
    %v146 = vsel %vm144, %v128, 0
    %v149 = vsel %vm144, %v129, 0
    %v152 = vsel %vm144, %v130, 0
    %v155 = vsel %vm144, %v131, 0
    %157 = vmatprep.subr.bf16.mxu0 0
    %158 = vmatpush1.bf16.msra.mxu0 %v140
    %159 = vmatprep.subr.bf16.mxu0 0
    %160 = vmatpush1.bf16.msra.mxu0 %v141
    %161 = vmatprep.subr.bf16.mxu0 0
    %162 = vmatpush1.bf16.msra.mxu0 0
    %163 = vmatprep.subr.bf16.mxu0 0
    %164 = vmatpush1.bf16.msra.mxu0 0
    %165 = vmatprep.subr.bf16.mxu0 0
    %166 = vmatpush1.bf16.msra.mxu0 0
    %167 = vmatprep.subr.bf16.mxu0 0
    %168 = vmatpush1.bf16.msra.mxu0 0
    %169 = vmatprep.subr.bf16.mxu0 0
    %170 = vmatpush1.bf16.msra.mxu0 0
    %171 = vmatprep.subr.bf16.mxu0 0
    %172 = vmatpush1.bf16.msra.mxu0 0
    %173 = vmatprep.subr.bf16.mxu0 0
    %174 = vmatpush1.bf16.msra.mxu0 0
    %175 = vmatprep.subr.bf16.mxu0 0
    %176 = vmatpush1.bf16.msra.mxu0 0
    %177 = vmatprep.subr.bf16.mxu0 0
    %178 = vmatpush1.bf16.msra.mxu0 0
    %179 = vmatprep.subr.bf16.mxu0 0
    %180 = vmatpush1.bf16.msra.mxu0 0
    %181 = vmatprep.subr.bf16.mxu0 0
    %182 = vmatpush1.bf16.msra.mxu0 0
    %183 = vmatprep.subr.bf16.mxu0 0
    %184 = vmatpush1.bf16.msra.mxu0 0
    %185 = vmatprep.subr.bf16.mxu0 0
    %186 = vmatpush1.bf16.msra.mxu0 0
    %187 = vmatprep.subr.bf16.mxu0 0
    %188 = vmatpush1.bf16.msra.mxu0 0
    %189 = vmatprep.mubr.bf16.mxu0 0
    %190 = vmatmul.mubr.bf16.gmra.mrb[0].mxu0 %v146
    %v191 = vpop.f32.mrb[0].mxu0
    %v192 = vadd.f32 0.0, %v191
    %v193 = vpop.f32.mrb[0].mxu0
    %v194 = vpop.f32.mrb[0].mxu0
    %v195 = vadd.f32 0.0, %v194
    %v196 = vpop.f32.mrb[0].mxu0
    %197 = vmatprep.mubr.bf16.mxu0 0
    %198 = vmatmul.mubr.bf16.gmra.mrb[0].mxu0 %v149
    %v199 = vpop.f32.mrb[0].mxu0
    %v200 = vadd.f32 0.0, %v199
    %v201 = vpop.f32.mrb[0].mxu0
    %v202 = vpop.f32.mrb[0].mxu0
    %v203 = vadd.f32 0.0, %v202
    %v204 = vpop.f32.mrb[0].mxu0
    %205 = vmatprep.mubr.bf16.mxu0 0
    %206 = vmatmul.mubr.bf16.gmra.mrb[0].mxu0 %v152
    %v207 = vpop.f32.mrb[0].mxu0
    %v208 = vadd.f32 0.0, %v207
    %v209 = vpop.f32.mrb[0].mxu0
    %v210 = vpop.f32.mrb[0].mxu0
    %v211 = vadd.f32 0.0, %v210
    %v212 = vpop.f32.mrb[0].mxu0
    %213 = vmatprep.mubr.bf16.mxu0 0
    %214 = vmatmul.mubr.bf16.gmra.mrb[0].mxu0 %v155
    %v215 = vpop.f32.mrb[0].mxu0
    %v216 = vadd.f32 0.0, %v215
    %v217 = vpop.f32.mrb[0].mxu0
    %v218 = vpop.f32.mrb[0].mxu0
    %v219 = vadd.f32 0.0, %v218
    %v220 = vpop.f32.mrb[0].mxu0
    %221 = vdwg.mxu0
    %v222 = vld [vmem:[%s6] sm:$0xff]
    %v223 = vld [vmem:[%s6 + $0x8] sm:$0xff]
    %v224 = vld [vmem:[%s6 + $0x10] sm:$0xff]
    %v225 = vld [vmem:[%s6 + $0x18] sm:$0xff]
    %v226 = vld [vmem:[#allocation7] sm:$0xff]
    %v227 = vld [vmem:[#allocation7 + $0x8] sm:$0xff]
    %v228 = vld [vmem:[#allocation7 + $0x10] sm:$0xff]
    %v229 = vld [vmem:[#allocation7 + $0x18] sm:$0xff]
    %v230 = vld [vmem:[%s8] sm:$0xff]
    %v231 = vld [vmem:[%s8 + $0x8] sm:$0xff]
    %v232 = vld [vmem:[%s8 + $0x10] sm:$0xff]
    %v233 = vld [vmem:[%s8 + $0x18] sm:$0xff]
    %v234 = vld [vmem:[%s8 + $0x20] sm:$0xff]
    %v235 = vld [vmem:[%s8 + $0x28] sm:$0xff]
    %v236 = vld [vmem:[%s8 + $0x30] sm:$0xff]
    %v237 = vld [vmem:[%s8 + $0x38] sm:$0xff]
    %v238 = vld [vmem:[%s8 + $0x40] sm:$0xff]
    %v239 = vld [vmem:[%s8 + $0x48] sm:$0xff]
    %v240 = vld [vmem:[%s8 + $0x50] sm:$0xff]
    %v241 = vld [vmem:[%s8 + $0x58] sm:$0xff]
    %v242 = vld [vmem:[%s8 + $0x60] sm:$0xff]
    %v243 = vld [vmem:[%s8 + $0x68] sm:$0xff]
    %v244 = vld [vmem:[%s8 + $0x70] sm:$0xff]
    %v245 = vld [vmem:[%s8 + $0x78] sm:$0xff]
    %v246 = vld [vmem:[#allocation4] sm:$0xf]
    %v247 = vld [vmem:[#allocation4 + $0x4] sm:$0xf]
    %v248 = vld [vmem:[#allocation4 + $0x8] sm:$0xf]
    %v249 = vld [vmem:[#allocation4 + $0xc] sm:$0xf]
    %v250 = vld [vmem:[%s1] sm:$0xf]
    %v251 = vld [vmem:[%s1 + $0x4] sm:$0xf]
    %v252 = vld [vmem:[%s1 + $0x8] sm:$0xf]
    %v253 = vld [vmem:[%s1 + $0xc] sm:$0xf]
    %v258 = vunpack.c.l.b16 %v246
    %v259 = vunpack.c.l.b16 %v247
    %v260 = vunpack.c.l.b16 %v248
    %v261 = vunpack.c.l.b16 %v249
    %v262 = vpack.c.b16 %v259, %v258
    %v263 = vpack.c.b16 %v261, %v260
    %v268 = vunpack.c.l.b16 %v250
    %v269 = vunpack.c.l.b16 %v251
    %v270 = vunpack.c.l.b16 %v252
    %v271 = vunpack.c.l.b16 %v253
    %v272 = vpack.c.b16 %v269, %v268
    %v273 = vpack.c.b16 %v271, %v270
    %v277 = vsel %vm144, %v262, 0
    %v280 = vsel %vm144, %v263, 0
    %282 = vmatprep.subr.bf16.mxu0 0
    %283 = vmatpush1.bf16.msra.mxu0 %v272
    %284 = vmatprep.subr.bf16.mxu0 0
    %285 = vmatpush1.bf16.msra.mxu0 %v273
    %286 = vmatprep.subr.bf16.mxu0 0
    %287 = vmatpush1.bf16.msra.mxu0 0
    %288 = vmatprep.subr.bf16.mxu0 0
    %289 = vmatpush1.bf16.msra.mxu0 0
    %290 = vmatprep.subr.bf16.mxu0 0
    %291 = vmatpush1.bf16.msra.mxu0 0
    %292 = vmatprep.subr.bf16.mxu0 0
    %293 = vmatpush1.bf16.msra.mxu0 0
    %294 = vmatprep.subr.bf16.mxu0 0
    %295 = vmatpush1.bf16.msra.mxu0 0
    %296 = vmatprep.subr.bf16.mxu0 0
    %297 = vmatpush1.bf16.msra.mxu0 0
    %298 = vmatprep.subr.bf16.mxu0 0
    %299 = vmatpush1.bf16.msra.mxu0 0
    %300 = vmatprep.subr.bf16.mxu0 0
    %301 = vmatpush1.bf16.msra.mxu0 0
    %302 = vmatprep.subr.bf16.mxu0 0
    %303 = vmatpush1.bf16.msra.mxu0 0
    %304 = vmatprep.subr.bf16.mxu0 0
    %305 = vmatpush1.bf16.msra.mxu0 0
    %306 = vmatprep.subr.bf16.mxu0 0
    %307 = vmatpush1.bf16.msra.mxu0 0
    %308 = vmatprep.subr.bf16.mxu0 0
    %309 = vmatpush1.bf16.msra.mxu0 0
    %310 = vmatprep.subr.bf16.mxu0 0
    %311 = vmatpush1.bf16.msra.mxu0 0
    %312 = vmatprep.subr.bf16.mxu0 0
    %313 = vmatpush1.bf16.msra.mxu0 0
    %314 = vmatprep.mubr.bf16.mxu0 0
    %315 = vmatmul.mubr.bf16.gmra.mrb[0].mxu0 %v277
    %v316 = vpop.f32.mrb[0].mxu0
    %v317 = vadd.f32 0.0, %v316
    %v318 = vpop.f32.mrb[0].mxu0
    %v319 = vpop.f32.mrb[0].mxu0
    %v320 = vadd.f32 0.0, %v319
    %v321 = vpop.f32.mrb[0].mxu0
    %322 = vmatprep.mubr.bf16.mxu0 0
    %323 = vmatmul.mubr.bf16.gmra.mrb[0].mxu0 %v280
    %v324 = vpop.f32.mrb[0].mxu0
    %v325 = vadd.f32 0.0, %v324
    %v326 = vpop.f32.mrb[0].mxu0
    %v327 = vpop.f32.mrb[0].mxu0
    %v328 = vadd.f32 0.0, %v327
    %v329 = vpop.f32.mrb[0].mxu0
    %330 = vdwg.mxu0
    %335 = vrot.lane.b32.xlu0 %v317, 32
    %v336 = vpop.permute.xlu0 %335
    %337 = vrot.lane.b32.xlu0 %v320, 32
    %v338 = vpop.permute.xlu0 %337
    %339 = vrot.lane.b32.xlu0 %v325, 32
    %v340 = vpop.permute.xlu0 %339
    %341 = vrot.lane.b32.xlu0 %v328, 32
    %v342 = vpop.permute.xlu0 %341
    %347 = vrot.lane.b32.xlu0 %v317, 64
    %v348 = vpop.permute.xlu0 %347
    %349 = vrot.lane.b32.xlu0 %v320, 64
    %v350 = vpop.permute.xlu0 %349
    %351 = vrot.lane.b32.xlu0 %v325, 64
    %v352 = vpop.permute.xlu0 %351
    %353 = vrot.lane.b32.xlu0 %v328, 64
    %v354 = vpop.permute.xlu0 %353
    %359 = vrot.lane.b32.xlu0 %v317, 96
    %v360 = vpop.permute.xlu0 %359
    %361 = vrot.lane.b32.xlu0 %v320, 96
    %v362 = vpop.permute.xlu0 %361
    %363 = vrot.lane.b32.xlu0 %v325, 96
    %v364 = vpop.permute.xlu0 %363
    %365 = vrot.lane.b32.xlu0 %v328, 96
    %v366 = vpop.permute.xlu0 %365
    %v371 = vsel %vm144, %v317, %v336
    %v372 = vsel %vm144, %v320, %v338
    %v373 = vsel %vm144, %v325, %v340
    %v374 = vsel %vm144, %v328, %v342
    %vm375 = vcmask 523264
    %v376 = vsel %vm375, %v371, %v348
    %v377 = vsel %vm375, %v372, %v350
    %v378 = vsel %vm375, %v373, %v352
    %v379 = vsel %vm375, %v374, %v354
    %vm380 = vcmask 785408
    %v381 = vsel %vm380, %v376, %v360
    %v382 = vsel %vm380, %v377, %v362
    %v383 = vsel %vm380, %v378, %v364
    %v384 = vsel %vm380, %v379, %v366
    %v385 = vmul.f32 %v381, %v226
    %v386 = vmul.f32 %v382, %v227
    %v387 = vmul.f32 %v383, %v228
    %v388 = vmul.f32 %v384, %v229
    %v389 = vpack.c.bf16 %v386, %v385
    %v390 = vpack.c.bf16 %v388, %v387
    %v391 = vpack.c.bf16 %v195, %v192
    %v392 = vpack.c.bf16 %v203, %v200
    %v394 = vsel %vm144, %v391, 0
    %v397 = vsel %vm144, %v392, 0
    %399 = vmatprep.subr.bf16.mxu0 0
    %400 = vmatpush1.bf16.msra.mxu0 %v389
    %401 = vmatprep.subr.bf16.mxu0 0
    %402 = vmatpush1.bf16.msra.mxu0 %v390
    %403 = vmatprep.subr.bf16.mxu0 0
    %404 = vmatpush1.bf16.msra.mxu0 0
    %405 = vmatprep.subr.bf16.mxu0 0
    %406 = vmatpush1.bf16.msra.mxu0 0
    %407 = vmatprep.subr.bf16.mxu0 0
    %408 = vmatpush1.bf16.msra.mxu0 0
    %409 = vmatprep.subr.bf16.mxu0 0
    %410 = vmatpush1.bf16.msra.mxu0 0
    %411 = vmatprep.subr.bf16.mxu0 0
    %412 = vmatpush1.bf16.msra.mxu0 0
    %413 = vmatprep.subr.bf16.mxu0 0
    %414 = vmatpush1.bf16.msra.mxu0 0
    %415 = vmatprep.subr.bf16.mxu0 0
    %416 = vmatpush1.bf16.msra.mxu0 0
    %417 = vmatprep.subr.bf16.mxu0 0
    %418 = vmatpush1.bf16.msra.mxu0 0
    %419 = vmatprep.subr.bf16.mxu0 0
    %420 = vmatpush1.bf16.msra.mxu0 0
    %421 = vmatprep.subr.bf16.mxu0 0
    %422 = vmatpush1.bf16.msra.mxu0 0
    %423 = vmatprep.subr.bf16.mxu0 0
    %424 = vmatpush1.bf16.msra.mxu0 0
    %425 = vmatprep.subr.bf16.mxu0 0
    %426 = vmatpush1.bf16.msra.mxu0 0
    %427 = vmatprep.subr.bf16.mxu0 0
    %428 = vmatpush1.bf16.msra.mxu0 0
    %429 = vmatprep.subr.bf16.mxu0 0
    %430 = vmatpush1.bf16.msra.mxu0 0
    %431 = vmatprep.mubr.bf16.mxu0 0
    %432 = vmatmul.mubr.bf16.gmra.mrb[0].mxu0 %v394
    %v433 = vpop.f32.mrb[0].mxu0
    %v434 = vadd.f32 %v222, %v433
    %v435 = vpop.f32.mrb[0].mxu0
    %v436 = vpop.f32.mrb[0].mxu0
    %v437 = vadd.f32 %v223, %v436
    %v438 = vpop.f32.mrb[0].mxu0
    %439 = vmatprep.mubr.bf16.mxu0 0
    %440 = vmatmul.mubr.bf16.gmra.mrb[0].mxu0 %v397
    %v441 = vpop.f32.mrb[0].mxu0
    %v442 = vadd.f32 %v224, %v441
    %v443 = vpop.f32.mrb[0].mxu0
    %v444 = vpop.f32.mrb[0].mxu0
    %v445 = vadd.f32 %v225, %v444
    %v446 = vpop.f32.mrb[0].mxu0
    %447 = vdwg.mxu0
    %v448 = vld [vmem:[%s1 + $0x10] sm:$0xf]
    %v449 = vld [vmem:[%s1 + $0x14] sm:$0xf]
    %v450 = vld [vmem:[%s1 + $0x18] sm:$0xf]
    %v451 = vld [vmem:[%s1 + $0x1c] sm:$0xf]
    %v456 = vunpack.c.l.b16 %v448
    %v457 = vunpack.c.l.b16 %v449
    %v458 = vunpack.c.l.b16 %v450
    %v459 = vunpack.c.l.b16 %v451
    %v460 = vpack.c.b16 %v457, %v456
    %v461 = vpack.c.b16 %v459, %v458
    %464 = vmatprep.subr.bf16.mxu0 0
    %465 = vmatpush1.bf16.msra.mxu0 %v460
    %466 = vmatprep.subr.bf16.mxu0 0
    %467 = vmatpush1.bf16.msra.mxu0 %v461
    %468 = vmatprep.subr.bf16.mxu0 0
    %469 = vmatpush1.bf16.msra.mxu0 0
    %470 = vmatprep.subr.bf16.mxu0 0
    %471 = vmatpush1.bf16.msra.mxu0 0
    %472 = vmatprep.subr.bf16.mxu0 0
    %473 = vmatpush1.bf16.msra.mxu0 0
    %474 = vmatprep.subr.bf16.mxu0 0
    %475 = vmatpush1.bf16.msra.mxu0 0
    %476 = vmatprep.subr.bf16.mxu0 0
    %477 = vmatpush1.bf16.msra.mxu0 0
    %478 = vmatprep.subr.bf16.mxu0 0
    %479 = vmatpush1.bf16.msra.mxu0 0
    %480 = vmatprep.subr.bf16.mxu0 0
    %481 = vmatpush1.bf16.msra.mxu0 0
    %482 = vmatprep.subr.bf16.mxu0 0
    %483 = vmatpush1.bf16.msra.mxu0 0
    %484 = vmatprep.subr.bf16.mxu0 0
    %485 = vmatpush1.bf16.msra.mxu0 0
    %486 = vmatprep.subr.bf16.mxu0 0
    %487 = vmatpush1.bf16.msra.mxu0 0
    %488 = vmatprep.subr.bf16.mxu0 0
    %489 = vmatpush1.bf16.msra.mxu0 0
    %490 = vmatprep.subr.bf16.mxu0 0
    %491 = vmatpush1.bf16.msra.mxu0 0
    %492 = vmatprep.subr.bf16.mxu0 0
    %493 = vmatpush1.bf16.msra.mxu0 0
    %494 = vmatprep.subr.bf16.mxu0 0
    %495 = vmatpush1.bf16.msra.mxu0 0
    %496 = vmatprep.mubr.bf16.mxu0 0
    %497 = vmatmul.mubr.bf16.gmra.mrb[0].mxu0 %v277
    %v498 = vpop.f32.mrb[0].mxu0
    %v499 = vadd.f32 0.0, %v498
    %v500 = vpop.f32.mrb[0].mxu0
    %v501 = vpop.f32.mrb[0].mxu0
    %v502 = vadd.f32 0.0, %v501
    %v503 = vpop.f32.mrb[0].mxu0
    %504 = vmatprep.mubr.bf16.mxu0 0
    %505 = vmatmul.mubr.bf16.gmra.mrb[0].mxu0 %v280
    %v506 = vpop.f32.mrb[0].mxu0
    %v507 = vadd.f32 0.0, %v506
    %v508 = vpop.f32.mrb[0].mxu0
    %v509 = vpop.f32.mrb[0].mxu0
    %v510 = vadd.f32 0.0, %v509
    %v511 = vpop.f32.mrb[0].mxu0
    %512 = vdwg.mxu0
    %517 = vrot.lane.b32.xlu0 %v499, 32
    %v518 = vpop.permute.xlu0 %517
    %519 = vrot.lane.b32.xlu0 %v502, 32
    %v520 = vpop.permute.xlu0 %519
    %521 = vrot.lane.b32.xlu0 %v507, 32
    %v522 = vpop.permute.xlu0 %521
    %523 = vrot.lane.b32.xlu0 %v510, 32
    %v524 = vpop.permute.xlu0 %523
    %529 = vrot.lane.b32.xlu0 %v499, 64
    %v530 = vpop.permute.xlu0 %529
    %531 = vrot.lane.b32.xlu0 %v502, 64
    %v532 = vpop.permute.xlu0 %531
    %533 = vrot.lane.b32.xlu0 %v507, 64
    %v534 = vpop.permute.xlu0 %533
    %535 = vrot.lane.b32.xlu0 %v510, 64
    %v536 = vpop.permute.xlu0 %535
    %541 = vrot.lane.b32.xlu0 %v499, 96
    %v542 = vpop.permute.xlu0 %541
    %543 = vrot.lane.b32.xlu0 %v502, 96
    %v544 = vpop.permute.xlu0 %543
    %545 = vrot.lane.b32.xlu0 %v507, 96
    %v546 = vpop.permute.xlu0 %545
    %547 = vrot.lane.b32.xlu0 %v510, 96
    %v548 = vpop.permute.xlu0 %547
    %v553 = vsel %vm144, %v499, %v518
    %v554 = vsel %vm144, %v502, %v520
    %v555 = vsel %vm144, %v507, %v522
    %v556 = vsel %vm144, %v510, %v524
    %v557 = vsel %vm375, %v553, %v530
    %v558 = vsel %vm375, %v554, %v532
    %v559 = vsel %vm375, %v555, %v534
    %v560 = vsel %vm375, %v556, %v536
    %v561 = vsel %vm380, %v557, %v542
    %v562 = vsel %vm380, %v558, %v544
    %v563 = vsel %vm380, %v559, %v546
    %v564 = vsel %vm380, %v560, %v548
    %v565 = vmul.f32 %v561, %v226
    %v566 = vmul.f32 %v562, %v227
    %v567 = vmul.f32 %v563, %v228
    %v568 = vmul.f32 %v564, %v229
    %v569 = vpack.c.bf16 %v566, %v565
    %v570 = vpack.c.bf16 %v568, %v567
    %v571 = vpack.c.bf16 %v211, %v208
    %v572 = vpack.c.bf16 %v219, %v216
    %v574 = vsel %vm144, %v571, 0
    %v577 = vsel %vm144, %v572, 0
    %579 = vmatprep.subr.bf16.mxu0 0
    %580 = vmatpush1.bf16.msra.mxu0 %v569
    %581 = vmatprep.subr.bf16.mxu0 0
    %582 = vmatpush1.bf16.msra.mxu0 %v570
    %583 = vmatprep.subr.bf16.mxu0 0
    %584 = vmatpush1.bf16.msra.mxu0 0
    %585 = vmatprep.subr.bf16.mxu0 0
    %586 = vmatpush1.bf16.msra.mxu0 0
    %587 = vmatprep.subr.bf16.mxu0 0
    %588 = vmatpush1.bf16.msra.mxu0 0
    %589 = vmatprep.subr.bf16.mxu0 0
    %590 = vmatpush1.bf16.msra.mxu0 0
    %591 = vmatprep.subr.bf16.mxu0 0
    %592 = vmatpush1.bf16.msra.mxu0 0
    %593 = vmatprep.subr.bf16.mxu0 0
    %594 = vmatpush1.bf16.msra.mxu0 0
    %595 = vmatprep.subr.bf16.mxu0 0
    %596 = vmatpush1.bf16.msra.mxu0 0
    %597 = vmatprep.subr.bf16.mxu0 0
    %598 = vmatpush1.bf16.msra.mxu0 0
    %599 = vmatprep.subr.bf16.mxu0 0
    %600 = vmatpush1.bf16.msra.mxu0 0
    %601 = vmatprep.subr.bf16.mxu0 0
    %602 = vmatpush1.bf16.msra.mxu0 0
    %603 = vmatprep.subr.bf16.mxu0 0
    %604 = vmatpush1.bf16.msra.mxu0 0
    %605 = vmatprep.subr.bf16.mxu0 0
    %606 = vmatpush1.bf16.msra.mxu0 0
    %607 = vmatprep.subr.bf16.mxu0 0
    %608 = vmatpush1.bf16.msra.mxu0 0
    %609 = vmatprep.subr.bf16.mxu0 0
    %610 = vmatpush1.bf16.msra.mxu0 0
    %611 = vmatprep.mubr.bf16.mxu0 0
    %612 = vmatmul.mubr.bf16.gmra.mrb[0].mxu0 %v574
    %v613 = vpop.f32.mrb[0].mxu0
    %v614 = vadd.f32 %v222, %v613
    %v615 = vpop.f32.mrb[0].mxu0
    %v616 = vpop.f32.mrb[0].mxu0
    %v617 = vadd.f32 %v223, %v616
    %v618 = vpop.f32.mrb[0].mxu0
    %619 = vmatprep.mubr.bf16.mxu0 0
    %620 = vmatmul.mubr.bf16.gmra.mrb[0].mxu0 %v577
    %v621 = vpop.f32.mrb[0].mxu0
    %v622 = vadd.f32 %v224, %v621
    %v623 = vpop.f32.mrb[0].mxu0
    %v624 = vpop.f32.mrb[0].mxu0
    %v625 = vadd.f32 %v225, %v624
    %v626 = vpop.f32.mrb[0].mxu0
    %627 = vdwg.mxu0
    %v628 = vpack.c.bf16 %v437, %v434
    %v629 = vpack.c.bf16 %v445, %v442
    %v630 = vpack.c.bf16 %v617, %v614
    %v631 = vpack.c.bf16 %v625, %v622
    %v632 = vld [vmem:[%s9] sm:$0xf]
    %v633 = vld [vmem:[%s9 + $0x4] sm:$0xf]
    %v634 = vld [vmem:[%s9 + $0x8] sm:$0xf]
    %v635 = vld [vmem:[%s9 + $0xc] sm:$0xf]
    %v636 = vld [vmem:[%s9 + $0x10] sm:$0xf]
    %v637 = vld [vmem:[%s9 + $0x14] sm:$0xf]
    %v638 = vld [vmem:[%s9 + $0x18] sm:$0xf]
    %v639 = vld [vmem:[%s9 + $0x1c] sm:$0xf]
    %v640 = vld [vmem:[%s9 + $0x20] sm:$0xf]
    %v641 = vld [vmem:[%s9 + $0x24] sm:$0xf]
    %v642 = vld [vmem:[%s9 + $0x28] sm:$0xf]
    %v643 = vld [vmem:[%s9 + $0x2c] sm:$0xf]
    %v644 = vld [vmem:[%s9 + $0x30] sm:$0xf]
    %v645 = vld [vmem:[%s9 + $0x34] sm:$0xf]
    %v646 = vld [vmem:[%s9 + $0x38] sm:$0xf]
    %v647 = vld [vmem:[%s9 + $0x3c] sm:$0xf]
    %v664 = vunpack.c.l.b16 %v632
    %v665 = vunpack.c.l.b16 %v633
    %v666 = vunpack.c.l.b16 %v634
    %v667 = vunpack.c.l.b16 %v635
    %v668 = vunpack.c.l.b16 %v636
    %v669 = vunpack.c.l.b16 %v637
    %v670 = vunpack.c.l.b16 %v638
    %v671 = vunpack.c.l.b16 %v639
    %v672 = vunpack.c.l.b16 %v640
    %v673 = vunpack.c.l.b16 %v641
    %v674 = vunpack.c.l.b16 %v642
    %v675 = vunpack.c.l.b16 %v643
    %v676 = vunpack.c.l.b16 %v644
    %v677 = vunpack.c.l.b16 %v645
    %v678 = vunpack.c.l.b16 %v646
    %v679 = vunpack.c.l.b16 %v647
    %v680 = vpack.c.b16 %v665, %v664
    %v681 = vpack.c.b16 %v667, %v666
    %v682 = vpack.c.b16 %v669, %v668
    %v683 = vpack.c.b16 %v671, %v670
    %v684 = vpack.c.b16 %v673, %v672
    %v685 = vpack.c.b16 %v675, %v674
    %v686 = vpack.c.b16 %v677, %v676
    %v687 = vpack.c.b16 %v679, %v678
    %696 = vmatprep.subr.bf16.mxu0 0
    %697 = vmatpush1.bf16.msra.mxu0 %v680
    %698 = vmatprep.subr.bf16.mxu0 0
    %699 = vmatpush1.bf16.msra.mxu0 %v681
    %700 = vmatprep.subr.bf16.mxu0 0
    %701 = vmatpush1.bf16.msra.mxu0 %v682
    %702 = vmatprep.subr.bf16.mxu0 0
    %703 = vmatpush1.bf16.msra.mxu0 %v683
    %704 = vmatprep.subr.bf16.mxu0 0
    %705 = vmatpush1.bf16.msra.mxu0 %v684
    %706 = vmatprep.subr.bf16.mxu0 0
    %707 = vmatpush1.bf16.msra.mxu0 %v685
    %708 = vmatprep.subr.bf16.mxu0 0
    %709 = vmatpush1.bf16.msra.mxu0 %v686
    %710 = vmatprep.subr.bf16.mxu0 0
    %711 = vmatpush1.bf16.msra.mxu0 %v687
    %712 = vmatprep.subr.bf16.mxu0 0
    %713 = vmatpush1.bf16.msra.mxu0 0
    %714 = vmatprep.subr.bf16.mxu0 0
    %715 = vmatpush1.bf16.msra.mxu0 0
    %716 = vmatprep.subr.bf16.mxu0 0
    %717 = vmatpush1.bf16.msra.mxu0 0
    %718 = vmatprep.subr.bf16.mxu0 0
    %719 = vmatpush1.bf16.msra.mxu0 0
    %720 = vmatprep.subr.bf16.mxu0 0
    %721 = vmatpush1.bf16.msra.mxu0 0
    %722 = vmatprep.subr.bf16.mxu0 0
    %723 = vmatpush1.bf16.msra.mxu0 0
    %724 = vmatprep.subr.bf16.mxu0 0
    %725 = vmatpush1.bf16.msra.mxu0 0
    %726 = vmatprep.subr.bf16.mxu0 0
    %727 = vmatpush1.bf16.msra.mxu0 0
    %728 = vmatprep.mubr.bf16.mxu0 0
    %729 = vmatmul.mubr.bf16.gmra.mrb[0].mxu0 %v628
    %v730 = vpop.f32.mrb[0].mxu0
    %v731 = vadd.f32 0.0, %v730
    %v732 = vpop.f32.mrb[0].mxu0
    %v733 = vpop.f32.mrb[0].mxu0
    %v734 = vadd.f32 0.0, %v733
    %v735 = vpop.f32.mrb[0].mxu0
    %736 = vmatprep.mubr.bf16.mxu0 0
    %737 = vmatmul.mubr.bf16.gmra.mrb[0].mxu0 %v629
    %v738 = vpop.f32.mrb[0].mxu0
    %v739 = vadd.f32 0.0, %v738
    %v740 = vpop.f32.mrb[0].mxu0
    %v741 = vpop.f32.mrb[0].mxu0
    %v742 = vadd.f32 0.0, %v741
    %v743 = vpop.f32.mrb[0].mxu0
    %744 = vmatprep.mubr.bf16.mxu0 0
    %745 = vmatmul.mubr.bf16.gmra.mrb[0].mxu0 %v630
    %v746 = vpop.f32.mrb[0].mxu0
    %v747 = vadd.f32 0.0, %v746
    %v748 = vpop.f32.mrb[0].mxu0
    %v749 = vpop.f32.mrb[0].mxu0
    %v750 = vadd.f32 0.0, %v749
    %v751 = vpop.f32.mrb[0].mxu0
    %752 = vmatprep.mubr.bf16.mxu0 0
    %753 = vmatmul.mubr.bf16.gmra.mrb[0].mxu0 %v631
    %v754 = vpop.f32.mrb[0].mxu0
    %v755 = vadd.f32 0.0, %v754
    %v756 = vpop.f32.mrb[0].mxu0
    %v757 = vpop.f32.mrb[0].mxu0
    %v758 = vadd.f32 0.0, %v757
    %v759 = vpop.f32.mrb[0].mxu0
    %760 = vdwg.mxu0
    %761 = vmax.xlane.f32.xlu0 %v731
    %v762 = vpop.xlane.xlu0 %761
    %763 = vmax.xlane.f32.xlu0 %v734
    %v764 = vpop.xlane.xlu0 %763
    %765 = vmax.xlane.f32.xlu0 %v739
    %v766 = vpop.xlane.xlu0 %765
    %767 = vmax.xlane.f32.xlu0 %v742
    %v768 = vpop.xlane.xlu0 %767
    %769 = vmax.xlane.f32.xlu0 %v747
    %v770 = vpop.xlane.xlu0 %769
    %771 = vmax.xlane.f32.xlu0 %v750
    %v772 = vpop.xlane.xlu0 %771
    %773 = vmax.xlane.f32.xlu0 %v755
    %v774 = vpop.xlane.xlu0 %773
    %775 = vmax.xlane.f32.xlu0 %v758
    %v776 = vpop.xlane.xlu0 %775
    %v777 = vsub.f32 %v731, %v762
    %v778 = vsub.f32 %v734, %v764
    %v779 = vsub.f32 %v739, %v766
    %v780 = vsub.f32 %v742, %v768
    %v781 = vsub.f32 %v747, %v770
    %v782 = vsub.f32 %v750, %v772
    %v783 = vsub.f32 %v755, %v774
    %v784 = vsub.f32 %v758, %v776
    %v785 = vmul.f32 %v777, 1.442695
    %v786 = vpow.pop %v785
    %v787 = vmul.f32 %v778, 1.442695
    %v788 = vpow.pop %v787
    %v789 = vmul.f32 %v779, 1.442695
    %v790 = vpow.pop %v789
    %v791 = vmul.f32 %v780, 1.442695
    %v792 = vpow.pop %v791
    %v793 = vmul.f32 %v781, 1.442695
    %v794 = vpow.pop %v793
    %v795 = vmul.f32 %v782, 1.442695
    %v796 = vpow.pop %v795
    %v797 = vmul.f32 %v783, 1.442695
    %v798 = vpow.pop %v797
    %v799 = vmul.f32 %v784, 1.442695
    %v800 = vpow.pop %v799
    %v801 = vpack.c.bf16 %v788, %v786
    %v802 = vpack.c.bf16 %v792, %v790
    %v803 = vpack.c.bf16 %v796, %v794
    %v804 = vpack.c.bf16 %v800, %v798
    %v805 = vld [vmem:[%s11] sm:$0xf]
    %v806 = vld [vmem:[%s11 + $0x4] sm:$0xf]
    %v807 = vld [vmem:[%s11 + $0x8] sm:$0xf]
    %v808 = vld [vmem:[%s11 + $0xc] sm:$0xf]
    %v809 = vld [vmem:[%s11 + $0x10] sm:$0xf]
    %v810 = vld [vmem:[%s11 + $0x14] sm:$0xf]
    %v811 = vld [vmem:[%s11 + $0x18] sm:$0xf]
    %v812 = vld [vmem:[%s11 + $0x1c] sm:$0xf]
    %v813 = vld [vmem:[%s11 + $0x20] sm:$0xf]
    %v814 = vld [vmem:[%s11 + $0x24] sm:$0xf]
    %v815 = vld [vmem:[%s11 + $0x28] sm:$0xf]
    %v816 = vld [vmem:[%s11 + $0x2c] sm:$0xf]
    %v817 = vld [vmem:[%s11 + $0x30] sm:$0xf]
    %v818 = vld [vmem:[%s11 + $0x34] sm:$0xf]
    %v819 = vld [vmem:[%s11 + $0x38] sm:$0xf]
    %v820 = vld [vmem:[%s11 + $0x3c] sm:$0xf]
    %v837 = vunpack.c.l.b16 %v805
    %v838 = vunpack.c.l.b16 %v806
    %v839 = vunpack.c.l.b16 %v807
    %v840 = vunpack.c.l.b16 %v808
    %v841 = vunpack.c.l.b16 %v809
    %v842 = vunpack.c.l.b16 %v810
    %v843 = vunpack.c.l.b16 %v811
    %v844 = vunpack.c.l.b16 %v812
    %v845 = vunpack.c.l.b16 %v813
    %v846 = vunpack.c.l.b16 %v814
    %v847 = vunpack.c.l.b16 %v815
    %v848 = vunpack.c.l.b16 %v816
    %v849 = vunpack.c.l.b16 %v817
    %v850 = vunpack.c.l.b16 %v818
    %v851 = vunpack.c.l.b16 %v819
    %v852 = vunpack.c.l.b16 %v820
    %v853 = vpack.c.b16 %v838, %v837
    %v854 = vpack.c.b16 %v840, %v839
    %v855 = vpack.c.b16 %v842, %v841
    %v856 = vpack.c.b16 %v844, %v843
    %v857 = vpack.c.b16 %v846, %v845
    %v858 = vpack.c.b16 %v848, %v847
    %v859 = vpack.c.b16 %v850, %v849
    %v860 = vpack.c.b16 %v852, %v851
    %869 = vmatprep.subr.bf16.mxu0 0
    %870 = vmatpush1.bf16.msra.mxu0 %v853
    %871 = vmatprep.subr.bf16.mxu0 0
    %872 = vmatpush1.bf16.msra.mxu0 %v854
    %873 = vmatprep.subr.bf16.mxu0 0
    %874 = vmatpush1.bf16.msra.mxu0 %v855
    %875 = vmatprep.subr.bf16.mxu0 0
    %876 = vmatpush1.bf16.msra.mxu0 %v856
    %877 = vmatprep.subr.bf16.mxu0 0
    %878 = vmatpush1.bf16.msra.mxu0 %v857
    %879 = vmatprep.subr.bf16.mxu0 0
    %880 = vmatpush1.bf16.msra.mxu0 %v858
    %881 = vmatprep.subr.bf16.mxu0 0
    %882 = vmatpush1.bf16.msra.mxu0 %v859
    %883 = vmatprep.subr.bf16.mxu0 0
    %884 = vmatpush1.bf16.msra.mxu0 %v860
    %885 = vmatprep.subr.bf16.mxu0 0
    %886 = vmatpush1.bf16.msra.mxu0 0
    %887 = vmatprep.subr.bf16.mxu0 0
    %888 = vmatpush1.bf16.msra.mxu0 0
    %889 = vmatprep.subr.bf16.mxu0 0
    %890 = vmatpush1.bf16.msra.mxu0 0
    %891 = vmatprep.subr.bf16.mxu0 0
    %892 = vmatpush1.bf16.msra.mxu0 0
    %893 = vmatprep.subr.bf16.mxu0 0
    %894 = vmatpush1.bf16.msra.mxu0 0
    %895 = vmatprep.subr.bf16.mxu0 0
    %896 = vmatpush1.bf16.msra.mxu0 0
    %897 = vmatprep.subr.bf16.mxu0 0
    %898 = vmatpush1.bf16.msra.mxu0 0
    %899 = vmatprep.subr.bf16.mxu0 0
    %900 = vmatpush1.bf16.msra.mxu0 0
    %901 = vmatprep.mubr.bf16.mxu0 0
    %902 = vmatmul.mubr.bf16.gmra.mrb[0].mxu0 %v801
    %v903 = vpop.f32.mrb[0].mxu0
    %v904 = vadd.f32 0.0, %v903
    %v905 = vpop.f32.mrb[0].mxu0
    %v906 = vpop.f32.mrb[0].mxu0
    %v907 = vadd.f32 0.0, %v906
    %v908 = vpop.f32.mrb[0].mxu0
    %909 = vmatprep.mubr.bf16.mxu0 0
    %910 = vmatmul.mubr.bf16.gmra.mrb[0].mxu0 %v802
    %v911 = vpop.f32.mrb[0].mxu0
    %v912 = vadd.f32 0.0, %v911
    %v913 = vpop.f32.mrb[0].mxu0
    %v914 = vpop.f32.mrb[0].mxu0
    %v915 = vadd.f32 0.0, %v914
    %v916 = vpop.f32.mrb[0].mxu0
    %917 = vmatprep.mubr.bf16.mxu0 0
    %918 = vmatmul.mubr.bf16.gmra.mrb[0].mxu0 %v803
    %v919 = vpop.f32.mrb[0].mxu0
    %v920 = vadd.f32 0.0, %v919
    %v921 = vpop.f32.mrb[0].mxu0
    %v922 = vpop.f32.mrb[0].mxu0
    %v923 = vadd.f32 0.0, %v922
    %v924 = vpop.f32.mrb[0].mxu0
    %925 = vmatprep.mubr.bf16.mxu0 0
    %926 = vmatmul.mubr.bf16.gmra.mrb[0].mxu0 %v804
    %v927 = vpop.f32.mrb[0].mxu0
    %v928 = vadd.f32 0.0, %v927
    %v929 = vpop.f32.mrb[0].mxu0
    %v930 = vpop.f32.mrb[0].mxu0
    %v931 = vadd.f32 0.0, %v930
    %v932 = vpop.f32.mrb[0].mxu0
    %933 = vdwg.mxu0
    %v934 = vrcp.pop %v904
    %v935 = vrcp.pop %v907
    %v936 = vrcp.pop %v912
    %v937 = vrcp.pop %v915
    %v938 = vrcp.pop %v920
    %v939 = vrcp.pop %v923
    %v940 = vrcp.pop %v928
    %v941 = vrcp.pop %v931
    %v942 = vmul.f32 %v786, %v934
    %v943 = vmul.f32 %v788, %v935
    %v944 = vmul.f32 %v790, %v936
    %v945 = vmul.f32 %v792, %v937
    %v946 = vmul.f32 %v794, %v938
    %v947 = vmul.f32 %v796, %v939
    %v948 = vmul.f32 %v798, %v940
    %v949 = vmul.f32 %v800, %v941
    %v950 = vpack.c.bf16 %v943, %v942
    %v951 = vpack.c.bf16 %v945, %v944
    %v952 = vpack.c.bf16 %v947, %v946
    %v953 = vpack.c.bf16 %v949, %v948
    %v954 = vld [vmem:[%s10] sm:$0xf]
    %v955 = vld [vmem:[%s10 + $0x4] sm:$0xf]
    %v956 = vld [vmem:[%s10 + $0x8] sm:$0xf]
    %v957 = vld [vmem:[%s10 + $0xc] sm:$0xf]
    %v958 = vld [vmem:[%s10 + $0x10] sm:$0xf]
    %v959 = vld [vmem:[%s10 + $0x14] sm:$0xf]
    %v960 = vld [vmem:[%s10 + $0x18] sm:$0xf]
    %v961 = vld [vmem:[%s10 + $0x1c] sm:$0xf]
    %v962 = vld [vmem:[%s10 + $0x20] sm:$0xf]
    %v963 = vld [vmem:[%s10 + $0x24] sm:$0xf]
    %v964 = vld [vmem:[%s10 + $0x28] sm:$0xf]
    %v965 = vld [vmem:[%s10 + $0x2c] sm:$0xf]
    %v966 = vld [vmem:[%s10 + $0x30] sm:$0xf]
    %v967 = vld [vmem:[%s10 + $0x34] sm:$0xf]
    %v968 = vld [vmem:[%s10 + $0x38] sm:$0xf]
    %v969 = vld [vmem:[%s10 + $0x3c] sm:$0xf]
    %v970 = vld [vmem:[%s12] sm:$0x1]
    %v972 = vlaneseq
    %v973 = vshrl.u32 %v972, 7
    %v974 = vsub.s32 0, %v973
    %v975 = vrot.slane %v970, %v974
    %v993 = vunpack.c.l.b16 %v954
    %v994 = vunpack.c.l.b16 %v955
    %v995 = vunpack.c.l.b16 %v956
    %v996 = vunpack.c.l.b16 %v957
    %v997 = vunpack.c.l.b16 %v958
    %v998 = vunpack.c.l.b16 %v959
    %v999 = vunpack.c.l.b16 %v960
    %v1000 = vunpack.c.l.b16 %v961
    %v1001 = vunpack.c.l.b16 %v962
    %v1002 = vunpack.c.l.b16 %v963
    %v1003 = vunpack.c.l.b16 %v964
    %v1004 = vunpack.c.l.b16 %v965
    %v1005 = vunpack.c.l.b16 %v966
    %v1006 = vunpack.c.l.b16 %v967
    %v1007 = vunpack.c.l.b16 %v968
    %v1008 = vunpack.c.l.b16 %v969
    %v1009 = vpack.c.b16 %v994, %v993
    %v1010 = vpack.c.b16 %v996, %v995
    %v1011 = vpack.c.b16 %v998, %v997
    %v1012 = vpack.c.b16 %v1000, %v999
    %v1013 = vpack.c.b16 %v1002, %v1001
    %v1014 = vpack.c.b16 %v1004, %v1003
    %v1015 = vpack.c.b16 %v1006, %v1005
    %v1016 = vpack.c.b16 %v1008, %v1007
    %1025 = vmatprep.subr.bf16.mxu0 0
    %1026 = vmatpush1.bf16.msra.mxu0 %v1009
    %1027 = vmatprep.subr.bf16.mxu0 0
    %1028 = vmatpush1.bf16.msra.mxu0 %v1010
    %1029 = vmatprep.subr.bf16.mxu0 0
    %1030 = vmatpush1.bf16.msra.mxu0 %v1011
    %1031 = vmatprep.subr.bf16.mxu0 0
    %1032 = vmatpush1.bf16.msra.mxu0 %v1012
    %1033 = vmatprep.subr.bf16.mxu0 0
    %1034 = vmatpush1.bf16.msra.mxu0 %v1013
    %1035 = vmatprep.subr.bf16.mxu0 0
    %1036 = vmatpush1.bf16.msra.mxu0 %v1014
    %1037 = vmatprep.subr.bf16.mxu0 0
    %1038 = vmatpush1.bf16.msra.mxu0 %v1015
    %1039 = vmatprep.subr.bf16.mxu0 0
    %1040 = vmatpush1.bf16.msra.mxu0 %v1016
    %1041 = vmatprep.subr.bf16.mxu0 0
    %1042 = vmatpush1.bf16.msra.mxu0 0
    %1043 = vmatprep.subr.bf16.mxu0 0
    %1044 = vmatpush1.bf16.msra.mxu0 0
    %1045 = vmatprep.subr.bf16.mxu0 0
    %1046 = vmatpush1.bf16.msra.mxu0 0
    %1047 = vmatprep.subr.bf16.mxu0 0
    %1048 = vmatpush1.bf16.msra.mxu0 0
    %1049 = vmatprep.subr.bf16.mxu0 0
    %1050 = vmatpush1.bf16.msra.mxu0 0
    %1051 = vmatprep.subr.bf16.mxu0 0
    %1052 = vmatpush1.bf16.msra.mxu0 0
    %1053 = vmatprep.subr.bf16.mxu0 0
    %1054 = vmatpush1.bf16.msra.mxu0 0
    %1055 = vmatprep.subr.bf16.mxu0 0
    %1056 = vmatpush1.bf16.msra.mxu0 0
    %1057 = vmatprep.mubr.bf16.mxu0 0
    %1058 = vmatmul.mubr.bf16.gmra.mrb[0].mxu0 %v950
    %v1059 = vpop.f32.mrb[0].mxu0
    %v1060 = vadd.f32 %v975, %v1059
    %v1061 = vpop.f32.mrb[0].mxu0
    %v1062 = vpop.f32.mrb[0].mxu0
    %v1063 = vadd.f32 %v975, %v1062
    %v1064 = vpop.f32.mrb[0].mxu0
    %1065 = vmatprep.mubr.bf16.mxu0 0
    %1066 = vmatmul.mubr.bf16.gmra.mrb[0].mxu0 %v951
    %v1067 = vpop.f32.mrb[0].mxu0
    %v1068 = vadd.f32 %v975, %v1067
    %v1069 = vpop.f32.mrb[0].mxu0
    %v1070 = vpop.f32.mrb[0].mxu0
    %v1071 = vadd.f32 %v975, %v1070
    %v1072 = vpop.f32.mrb[0].mxu0
    %1073 = vmatprep.mubr.bf16.mxu0 0
    %1074 = vmatmul.mubr.bf16.gmra.mrb[0].mxu0 %v952
    %v1075 = vpop.f32.mrb[0].mxu0
    %v1076 = vadd.f32 %v975, %v1075
    %v1077 = vpop.f32.mrb[0].mxu0
    %v1078 = vpop.f32.mrb[0].mxu0
    %v1079 = vadd.f32 %v975, %v1078
    %v1080 = vpop.f32.mrb[0].mxu0
    %1081 = vmatprep.mubr.bf16.mxu0 0
    %1082 = vmatmul.mubr.bf16.gmra.mrb[0].mxu0 %v953
    %v1083 = vpop.f32.mrb[0].mxu0
    %v1084 = vadd.f32 %v975, %v1083
    %v1085 = vpop.f32.mrb[0].mxu0
    %v1086 = vpop.f32.mrb[0].mxu0
    %v1087 = vadd.f32 %v975, %v1086
    %v1088 = vpop.f32.mrb[0].mxu0
    %1089 = vdwg.mxu0
    %1106 = vrot.lane.b32.xlu0 %v230, 32
    %v1107 = vpop.permute.xlu0 %1106
    %1108 = vrot.lane.b32.xlu0 %v231, 32
    %v1109 = vpop.permute.xlu0 %1108
    %1110 = vrot.lane.b32.xlu0 %v232, 32
    %v1111 = vpop.permute.xlu0 %1110
    %1112 = vrot.lane.b32.xlu0 %v233, 32
    %v1113 = vpop.permute.xlu0 %1112
    %1114 = vrot.lane.b32.xlu0 %v234, 32
    %v1115 = vpop.permute.xlu0 %1114
    %1116 = vrot.lane.b32.xlu0 %v235, 32
    %v1117 = vpop.permute.xlu0 %1116
    %1118 = vrot.lane.b32.xlu0 %v236, 32
    %v1119 = vpop.permute.xlu0 %1118
    %1120 = vrot.lane.b32.xlu0 %v237, 32
    %v1121 = vpop.permute.xlu0 %1120
    %1122 = vrot.lane.b32.xlu0 %v238, 32
    %v1123 = vpop.permute.xlu0 %1122
    %1124 = vrot.lane.b32.xlu0 %v239, 32
    %v1125 = vpop.permute.xlu0 %1124
    %1126 = vrot.lane.b32.xlu0 %v240, 32
    %v1127 = vpop.permute.xlu0 %1126
    %1128 = vrot.lane.b32.xlu0 %v241, 32
    %v1129 = vpop.permute.xlu0 %1128
    %1130 = vrot.lane.b32.xlu0 %v242, 32
    %v1131 = vpop.permute.xlu0 %1130
    %1132 = vrot.lane.b32.xlu0 %v243, 32
    %v1133 = vpop.permute.xlu0 %1132
    %1134 = vrot.lane.b32.xlu0 %v244, 32
    %v1135 = vpop.permute.xlu0 %1134
    %1136 = vrot.lane.b32.xlu0 %v245, 32
    %v1137 = vpop.permute.xlu0 %1136
    %v1154 = vmul.f32 %v192, %v1107
    %v1155 = vmul.f32 %v195, %v1109
    %v1156 = vmul.f32 %v200, %v1111
    %v1157 = vmul.f32 %v203, %v1113
    %v1158 = vmul.f32 %v192, %v1115
    %v1159 = vmul.f32 %v195, %v1117
    %v1160 = vmul.f32 %v200, %v1119
    %v1161 = vmul.f32 %v203, %v1121
    %v1162 = vmul.f32 %v192, %v1123
    %v1163 = vmul.f32 %v195, %v1125
    %v1164 = vmul.f32 %v200, %v1127
    %v1165 = vmul.f32 %v203, %v1129
    %v1166 = vmul.f32 %v192, %v1131
    %v1167 = vmul.f32 %v195, %v1133
    %v1168 = vmul.f32 %v200, %v1135
    %v1169 = vmul.f32 %v203, %v1137
    %v1170 = vpack.c.bf16 %v1155, %v1154
    %v1171 = vpack.c.bf16 %v1157, %v1156
    %v1172 = vpack.c.bf16 %v1159, %v1158
    %v1173 = vpack.c.bf16 %v1161, %v1160
    %v1174 = vpack.c.bf16 %v1163, %v1162
    %v1175 = vpack.c.bf16 %v1165, %v1164
    %v1176 = vpack.c.bf16 %v1167, %v1166
    %v1177 = vpack.c.bf16 %v1169, %v1168
    %v1178 = vpack.c.bf16 %v1063, %v1060
    %v1179 = vpack.c.bf16 %v1071, %v1068
    %1188 = vrot.lane.b32.xlu0 %v1170, 96
    %v1189 = vpop.permute.xlu0 %1188
    %1190 = vrot.lane.b32.xlu0 %v1171, 96
    %v1191 = vpop.permute.xlu0 %1190
    %1192 = vrot.lane.b32.xlu0 %v1172, 96
    %v1193 = vpop.permute.xlu0 %1192
    %1194 = vrot.lane.b32.xlu0 %v1173, 96
    %v1195 = vpop.permute.xlu0 %1194
    %1196 = vrot.lane.b32.xlu0 %v1174, 96
    %v1197 = vpop.permute.xlu0 %1196
    %1198 = vrot.lane.b32.xlu0 %v1175, 96
    %v1199 = vpop.permute.xlu0 %1198
    %1200 = vrot.lane.b32.xlu0 %v1176, 96
    %v1201 = vpop.permute.xlu0 %1200
    %1202 = vrot.lane.b32.xlu0 %v1177, 96
    %v1203 = vpop.permute.xlu0 %1202
    %1212 = vmatprep.subr.bf16.mxu0 0
    %1213 = vmatpush1.bf16.msra.mxu0 %v1189
    %1214 = vmatprep.subr.bf16.mxu0 0
    %1215 = vmatpush1.bf16.msra.mxu0 %v1191
    %1216 = vmatprep.subr.bf16.mxu0 0
    %1217 = vmatpush1.bf16.msra.mxu0 %v1193
    %1218 = vmatprep.subr.bf16.mxu0 0
    %1219 = vmatpush1.bf16.msra.mxu0 %v1195
    %1220 = vmatprep.subr.bf16.mxu0 0
    %1221 = vmatpush1.bf16.msra.mxu0 %v1197
    %1222 = vmatprep.subr.bf16.mxu0 0
    %1223 = vmatpush1.bf16.msra.mxu0 %v1199
    %1224 = vmatprep.subr.bf16.mxu0 0
    %1225 = vmatpush1.bf16.msra.mxu0 %v1201
    %1226 = vmatprep.subr.bf16.mxu0 0
    %1227 = vmatpush1.bf16.msra.mxu0 %v1203
    %1228 = vmatprep.subr.bf16.mxu0 0
    %1229 = vmatpush1.bf16.msra.mxu0 0
    %1230 = vmatprep.subr.bf16.mxu0 0
    %1231 = vmatpush1.bf16.msra.mxu0 0
    %1232 = vmatprep.subr.bf16.mxu0 0
    %1233 = vmatpush1.bf16.msra.mxu0 0
    %1234 = vmatprep.subr.bf16.mxu0 0
    %1235 = vmatpush1.bf16.msra.mxu0 0
    %1236 = vmatprep.subr.bf16.mxu0 0
    %1237 = vmatpush1.bf16.msra.mxu0 0
    %1238 = vmatprep.subr.bf16.mxu0 0
    %1239 = vmatpush1.bf16.msra.mxu0 0
    %1240 = vmatprep.subr.bf16.mxu0 0
    %1241 = vmatpush1.bf16.msra.mxu0 0
    %1242 = vmatprep.subr.bf16.mxu0 0
    %1243 = vmatpush1.bf16.msra.mxu0 0
    %1244 = vmatprep.mubr.bf16.mxu0 0
    %1245 = vmatmul.mubr.bf16.gmra.mrb[0].mxu0 %v1178
    %v1246 = vpop.f32.mrb[0].mxu0
    %v1247 = vadd.f32 0.0, %v1246
    %v1248 = vpop.f32.mrb[0].mxu0
    %v1249 = vpop.f32.mrb[0].mxu0
    %v1250 = vadd.f32 0.0, %v1249
    %v1251 = vpop.f32.mrb[0].mxu0
    %1252 = vmatprep.mubr.bf16.mxu0 0
    %1253 = vmatmul.mubr.bf16.gmra.mrb[0].mxu0 %v1179
    %v1254 = vpop.f32.mrb[0].mxu0
    %v1255 = vadd.f32 0.0, %v1254
    %v1256 = vpop.f32.mrb[0].mxu0
    %v1257 = vpop.f32.mrb[0].mxu0
    %v1258 = vadd.f32 0.0, %v1257
    %v1259 = vpop.f32.mrb[0].mxu0
    %1260 = vdwg.mxu0
    %v1261 = vmul.f32 %v208, %v1107
    %v1262 = vmul.f32 %v211, %v1109
    %v1263 = vmul.f32 %v216, %v1111
    %v1264 = vmul.f32 %v219, %v1113
    %v1265 = vmul.f32 %v208, %v1115
    %v1266 = vmul.f32 %v211, %v1117
    %v1267 = vmul.f32 %v216, %v1119
    %v1268 = vmul.f32 %v219, %v1121
    %v1269 = vmul.f32 %v208, %v1123
    %v1270 = vmul.f32 %v211, %v1125
    %v1271 = vmul.f32 %v216, %v1127
    %v1272 = vmul.f32 %v219, %v1129
    %v1273 = vmul.f32 %v208, %v1131
    %v1274 = vmul.f32 %v211, %v1133
    %v1275 = vmul.f32 %v216, %v1135
    %v1276 = vmul.f32 %v219, %v1137
    %v1277 = vpack.c.bf16 %v1262, %v1261
    %v1278 = vpack.c.bf16 %v1264, %v1263
    %v1279 = vpack.c.bf16 %v1266, %v1265
    %v1280 = vpack.c.bf16 %v1268, %v1267
    %v1281 = vpack.c.bf16 %v1270, %v1269
    %v1282 = vpack.c.bf16 %v1272, %v1271
    %v1283 = vpack.c.bf16 %v1274, %v1273
    %v1284 = vpack.c.bf16 %v1276, %v1275
    %v1285 = vpack.c.bf16 %v1079, %v1076
    %v1286 = vpack.c.bf16 %v1087, %v1084
    %1295 = vrot.lane.b32.xlu0 %v1277, 96
    %v1296 = vpop.permute.xlu0 %1295
    %1297 = vrot.lane.b32.xlu0 %v1278, 96
    %v1298 = vpop.permute.xlu0 %1297
    %1299 = vrot.lane.b32.xlu0 %v1279, 96
    %v1300 = vpop.permute.xlu0 %1299
    %1301 = vrot.lane.b32.xlu0 %v1280, 96
    %v1302 = vpop.permute.xlu0 %1301
    %1303 = vrot.lane.b32.xlu0 %v1281, 96
    %v1304 = vpop.permute.xlu0 %1303
    %1305 = vrot.lane.b32.xlu0 %v1282, 96
    %v1306 = vpop.permute.xlu0 %1305
    %1307 = vrot.lane.b32.xlu0 %v1283, 96
    %v1308 = vpop.permute.xlu0 %1307
    %1309 = vrot.lane.b32.xlu0 %v1284, 96
    %v1310 = vpop.permute.xlu0 %1309
    %1319 = vmatprep.subr.bf16.mxu0 0
    %1320 = vmatpush1.bf16.msra.mxu0 %v1296
    %1321 = vmatprep.subr.bf16.mxu0 0
    %1322 = vmatpush1.bf16.msra.mxu0 %v1298
    %1323 = vmatprep.subr.bf16.mxu0 0
    %1324 = vmatpush1.bf16.msra.mxu0 %v1300
    %1325 = vmatprep.subr.bf16.mxu0 0
    %1326 = vmatpush1.bf16.msra.mxu0 %v1302
    %1327 = vmatprep.subr.bf16.mxu0 0
    %1328 = vmatpush1.bf16.msra.mxu0 %v1304
    %1329 = vmatprep.subr.bf16.mxu0 0
    %1330 = vmatpush1.bf16.msra.mxu0 %v1306
    %1331 = vmatprep.subr.bf16.mxu0 0
    %1332 = vmatpush1.bf16.msra.mxu0 %v1308
    %1333 = vmatprep.subr.bf16.mxu0 0
    %1334 = vmatpush1.bf16.msra.mxu0 %v1310
    %1335 = vmatprep.subr.bf16.mxu0 0
    %1336 = vmatpush1.bf16.msra.mxu0 0
    %1337 = vmatprep.subr.bf16.mxu0 0
    %1338 = vmatpush1.bf16.msra.mxu0 0
    %1339 = vmatprep.subr.bf16.mxu0 0
    %1340 = vmatpush1.bf16.msra.mxu0 0
    %1341 = vmatprep.subr.bf16.mxu0 0
    %1342 = vmatpush1.bf16.msra.mxu0 0
    %1343 = vmatprep.subr.bf16.mxu0 0
    %1344 = vmatpush1.bf16.msra.mxu0 0
    %1345 = vmatprep.subr.bf16.mxu0 0
    %1346 = vmatpush1.bf16.msra.mxu0 0
    %1347 = vmatprep.subr.bf16.mxu0 0
    %1348 = vmatpush1.bf16.msra.mxu0 0
    %1349 = vmatprep.subr.bf16.mxu0 0
    %1350 = vmatpush1.bf16.msra.mxu0 0
    %1351 = vmatprep.mubr.bf16.mxu0 0
    %1352 = vmatmul.mubr.bf16.gmra.mrb[0].mxu0 %v1285
    %v1353 = vpop.f32.mrb[0].mxu0
    %v1354 = vadd.f32 0.0, %v1353
    %v1355 = vpop.f32.mrb[0].mxu0
    %v1356 = vpop.f32.mrb[0].mxu0
    %v1357 = vadd.f32 0.0, %v1356
    %v1358 = vpop.f32.mrb[0].mxu0
    %1359 = vmatprep.mubr.bf16.mxu0 0
    %1360 = vmatmul.mubr.bf16.gmra.mrb[0].mxu0 %v1286
    %v1361 = vpop.f32.mrb[0].mxu0
    %v1362 = vadd.f32 0.0, %v1361
    %v1363 = vpop.f32.mrb[0].mxu0
    %v1364 = vpop.f32.mrb[0].mxu0
    %v1365 = vadd.f32 0.0, %v1364
    %v1366 = vpop.f32.mrb[0].mxu0
    %1367 = vdwg.mxu0
    %v1368 = vpack.c.bf16 %v1250, %v1247
    %v1369 = vpack.c.bf16 %v1258, %v1255
    %v1370 = vpack.c.bf16 %v1357, %v1354
    %v1371 = vpack.c.bf16 %v1365, %v1362
    %v1372 = vld [vmem:[#allocation6] sm:$0xf]
    %v1373 = vld [vmem:[#allocation6 + $0x4] sm:$0xf]
    %v1374 = vld [vmem:[#allocation6 + $0x8] sm:$0xf]
    %v1375 = vld [vmem:[#allocation6 + $0xc] sm:$0xf]
    %v1376 = vld [vmem:[%s5] sm:$0x1]
    %v1378 = vlaneseq
    %v1379 = vshrl.u32 %v1378, 7
    %v1380 = vsub.s32 0, %v1379
    %v1381 = vrot.slane %v1376, %v1380
    %v1387 = vunpack.c.l.b16 %v1372
    %v1388 = vunpack.c.l.b16 %v1373
    %v1389 = vunpack.c.l.b16 %v1374
    %v1390 = vunpack.c.l.b16 %v1375
    %v1391 = vpack.c.b16 %v1388, %v1387
    %v1392 = vpack.c.b16 %v1390, %v1389
    %v1396 = vsel %vm144, %v1368, 0
    %v1399 = vsel %vm144, %v1369, 0
    %v1402 = vsel %vm144, %v1370, 0
    %v1405 = vsel %vm144, %v1371, 0
    %1407 = vmatprep.subr.bf16.mxu0 0
    %1408 = vmatpush1.bf16.msra.mxu0 %v1391
    %1409 = vmatprep.subr.bf16.mxu0 0
    %1410 = vmatpush1.bf16.msra.mxu0 %v1392
    %1411 = vmatprep.subr.bf16.mxu0 0
    %1412 = vmatpush1.bf16.msra.mxu0 0
    %1413 = vmatprep.subr.bf16.mxu0 0
    %1414 = vmatpush1.bf16.msra.mxu0 0
    %1415 = vmatprep.subr.bf16.mxu0 0
    %1416 = vmatpush1.bf16.msra.mxu0 0
    %1417 = vmatprep.subr.bf16.mxu0 0
    %1418 = vmatpush1.bf16.msra.mxu0 0
    %1419 = vmatprep.subr.bf16.mxu0 0
    %1420 = vmatpush1.bf16.msra.mxu0 0
    %1421 = vmatprep.subr.bf16.mxu0 0
    %1422 = vmatpush1.bf16.msra.mxu0 0
    %1423 = vmatprep.subr.bf16.mxu0 0
    %1424 = vmatpush1.bf16.msra.mxu0 0
    %1425 = vmatprep.subr.bf16.mxu0 0
    %1426 = vmatpush1.bf16.msra.mxu0 0
    %1427 = vmatprep.subr.bf16.mxu0 0
    %1428 = vmatpush1.bf16.msra.mxu0 0
    %1429 = vmatprep.subr.bf16.mxu0 0
    %1430 = vmatpush1.bf16.msra.mxu0 0
    %1431 = vmatprep.subr.bf16.mxu0 0
    %1432 = vmatpush1.bf16.msra.mxu0 0
    %1433 = vmatprep.subr.bf16.mxu0 0
    %1434 = vmatpush1.bf16.msra.mxu0 0
    %1435 = vmatprep.subr.bf16.mxu0 0
    %1436 = vmatpush1.bf16.msra.mxu0 0
    %1437 = vmatprep.subr.bf16.mxu0 0
    %1438 = vmatpush1.bf16.msra.mxu0 0
    %1439 = vmatprep.mubr.bf16.mxu0 0
    %1440 = vmatmul.mubr.bf16.gmra.mrb[0].mxu0 %v1396
    %v1441 = vpop.f32.mrb[0].mxu0
    %v1442 = vadd.f32 %v1381, %v1441
    %v1443 = vpop.f32.mrb[0].mxu0
    %v1444 = vpop.f32.mrb[0].mxu0
    %v1445 = vadd.f32 %v1381, %v1444
    %v1446 = vpop.f32.mrb[0].mxu0
    %1447 = vmatprep.mubr.bf16.mxu0 0
    %1448 = vmatmul.mubr.bf16.gmra.mrb[0].mxu0 %v1399
    %v1449 = vpop.f32.mrb[0].mxu0
    %v1450 = vadd.f32 %v1381, %v1449
    %v1451 = vpop.f32.mrb[0].mxu0
    %v1452 = vpop.f32.mrb[0].mxu0
    %v1453 = vadd.f32 %v1381, %v1452
    %v1454 = vpop.f32.mrb[0].mxu0
    %1455 = vmatprep.mubr.bf16.mxu0 0
    %1456 = vmatmul.mubr.bf16.gmra.mrb[0].mxu0 %v1402
    %v1457 = vpop.f32.mrb[0].mxu0
    %v1458 = vadd.f32 %v1381, %v1457
    %v1459 = vpop.f32.mrb[0].mxu0
    %v1460 = vpop.f32.mrb[0].mxu0
    %v1461 = vadd.f32 %v1381, %v1460
    %v1462 = vpop.f32.mrb[0].mxu0
    %1463 = vmatprep.mubr.bf16.mxu0 0
    %1464 = vmatmul.mubr.bf16.gmra.mrb[0].mxu0 %v1405
    %v1465 = vpop.f32.mrb[0].mxu0
    %v1466 = vadd.f32 %v1381, %v1465
    %v1467 = vpop.f32.mrb[0].mxu0
    %v1468 = vpop.f32.mrb[0].mxu0
    %v1469 = vadd.f32 %v1381, %v1468
    %v1470 = vpop.f32.mrb[0].mxu0
    %1471 = vdwg.mxu0
    %1472 = vst.msk [vmem:[%s13] sm:$0xff] %vm144, %v1442
    %1473 = vst.msk [vmem:[%s13 + $0x8] sm:$0xff] %vm144, %v1445
    %1474 = vst.msk [vmem:[%s13 + $0x10] sm:$0xff] %vm144, %v1450
    %1475 = vst.msk [vmem:[%s13 + $0x18] sm:$0xff] %vm144, %v1453
    %1476 = vst.msk [vmem:[%s13 + $0x20] sm:$0xff] %vm144, %v1458
    %1477 = vst.msk [vmem:[%s13 + $0x28] sm:$0xff] %vm144, %v1461
    %1478 = vst.msk [vmem:[%s13 + $0x30] sm:$0xff] %vm144, %v1466
    %1479 = vst.msk [vmem:[%s13 + $0x38] sm:$0xff] %vm144, %v1469
    // Predicated region
    $region70: #{tpu_custom_call.1} parent=1 // pred_check
      _
    $region71: #{tpu_custom_call.1} parent=1 // pred_check_branch
      %1481 = sbr.rel (0) target = $region73
    $region72: #{tpu_custom_call.1} parent=1 // pred_region
      _
    $region73: #{tpu_custom_call.1} parent=1 // pred_fallthru
      _
    // Predicated region
    $region74: #{tpu_custom_call.1} parent=1 // pred_check
      _
    $region75: #{tpu_custom_call.1} parent=1 // pred_check_branch
      %1483 = sbr.rel (0) target = $region77
    $region76: #{tpu_custom_call.1} parent=1 // pred_region
      _
    $region77: #{tpu_custom_call.1} parent=1 // pred_fallthru
      _
    %1484 = vsyncpa [#allocation3], 1
    %1485 = vsyncpa [#allocation5], 1
    %1486 = vsyncpa [#allocation8], 1

</llo_original>
